<compile_context>
chip_gen: v7x
topology: tpu7x:2x2x1
jax: 0.10.0
libtpu: 0.0.40
codegen_flags: <defaults>
</compile_context>

<pallas_src>
import functools

import jax
import jax.numpy as jnp
from jax import lax
from jax.experimental import pallas as pl
from jax.experimental.pallas import tpu as pltpu


def _round_up(a, b):
    return (a + b - 1) // b * b


def _conv3d_im2col_kernel(xc_ref, xn_ref, w_ref, y_ref, col_ref, *,
                          kt, kh, kw, c_in, s_frame, s_row, l_tile, k_pad):
    """One (batch, L-tile) grid step of the causal 3-D conv.

    xc_ref:  (1, C_in, L_tile)   current input chunk (bf16)
    xn_ref:  (1, C_in, L_tile)   next input chunk = halo for the tap offsets
    w_ref:   (C_out, K_pad)      fused tap weights, resident across the grid
    y_ref:   (1, C_out, L_tile)  output tile
    col_ref: (K_pad, L_tile)     im2col scratch in VMEM
    """
    k = kt * kh * kw * c_in
    # --- build the im2col RHS: one (C_in, L_tile) slab per tap, static slices ---
    for dt in range(kt):
        for dh in range(kh):
            for dw in range(kw):
                tap = (dt * kh + dh) * kw + dw
                off = dt * s_frame + dh * s_row + dw   # static Python int < l_tile
                row = tap * c_in
                if off == 0:
                    col_ref[row:row + c_in, :] = xc_ref[0]
                else:
                    split = l_tile - off
                    # window [off, off + L_tile) = cur[off:] ++ nxt[:off]
                    col_ref[row:row + c_in, 0:split] = xc_ref[0, :, off:l_tile]
                    col_ref[row:row + c_in, split:l_tile] = xn_ref[0, :, 0:off]
    if k_pad > k:
        # Keep the K-padding rows zero so the zero weight columns never see
        # garbage (scratch is uninitialized VMEM).
        col_ref[k:k_pad, :] = jnp.zeros((k_pad - k, l_tile), col_ref.dtype)

    # --- single fused MXU matmul (K = 27*C_in padded to 128), f32 accumulate ---
    # TODO(synk): for layers with C_out >= 128 the flipped orientation
    # (L_tile as the MXU M dimension) would fill the array better.
    y = jnp.dot(w_ref[...], col_ref[...], preferred_element_type=jnp.float32)
    y_ref[0] = y.astype(y_ref.dtype)   # single lane-dense store per tile


@functools.partial(
    jax.jit,
    static_argnames=("kt", "kh", "kw", "s_frame", "s_row", "l_tile", "k_pad",
                     "out_dtype"))
def _conv3d_flat(x_flat, w_fused, *, kt, kh, kw, s_frame, s_row, l_tile, k_pad,
                 out_dtype):
    n, c_in, l_pad = x_flat.shape
    c_out, _ = w_fused.shape
    nj = l_pad // l_tile - 1           # last chunk is halo-only
    l_out_p = nj * l_tile

    in_dtype = x_flat.dtype
    bpe = jnp.dtype(in_dtype).itemsize
    out_bpe = jnp.dtype(out_dtype).itemsize

    kernel = functools.partial(_conv3d_im2col_kernel, kt=kt, kh=kh, kw=kw,
                               c_in=c_in, s_frame=s_frame, s_row=s_row,
                               l_tile=l_tile, k_pad=k_pad)

    grid_spec = pltpu.PrefetchScalarGridSpec(
        num_scalar_prefetch=0,
        grid=(n, nj),
        in_specs=[
            # current L chunk
            pl.BlockSpec((1, c_in, l_tile), lambda i, j: (i, 0, j)),
            # next L chunk (halo for the tap offsets); same array, shifted index
            pl.BlockSpec((1, c_in, l_tile), lambda i, j: (i, 0, j + 1)),
            # fused weights: constant block index -> DMA'd once, resident
            pl.BlockSpec((c_out, k_pad), lambda i, j: (0, 0)),
        ],
        out_specs=pl.BlockSpec((1, c_out, l_tile), lambda i, j: (i, 0, j)),
        scratch_shapes=[pltpu.VMEM((k_pad, l_tile), in_dtype)],
    )

    # VMEM budget: double-buffered input chunks (x2 specs), resident weights,
    # im2col scratch, double-buffered output tile.
    vmem_needed = (2 * 2 * c_in * l_tile * bpe
                   + 2 * c_out * k_pad * bpe
                   + k_pad * l_tile * bpe
                   + 2 * c_out * l_tile * out_bpe)
    vmem_limit = int(min(48 * 2**20, max(16 * 2**20, 2 * vmem_needed + (4 << 20))))

    cost = pl.CostEstimate(
        flops=2 * n * nj * c_out * k_pad * l_tile,
        transcendentals=0,
        bytes_accessed=int(2 * x_flat.size * bpe + w_fused.size * bpe
                           + n * c_out * l_out_p * out_bpe))

    return pl.pallas_call(
        kernel,
        out_shape=jax.ShapeDtypeStruct((n, c_out, l_out_p), out_dtype),
        grid_spec=grid_spec,
        compiler_params=pltpu.CompilerParams(
            dimension_semantics=("parallel", "parallel"),
            vmem_limit_bytes=vmem_limit),
        cost_estimate=cost,
    )(x_flat, x_flat, w_fused)


def conv_block_3d_forward(x, weight, activation=None, *, spatial_padding=(1, 1),
                          compute_dtype=jnp.bfloat16, l_tile_min=512):
    """Functional ConvBlock3D.forward (conv_type='3d', causal=True, stride=1).

    Args:
      x: (N, C_in, T, H, W) input clip.
      weight: (C_out, C_in, KT, KH, KW) Conv3d weight (bias=False).
      activation: None or (N, C_in, KT-1, H, W) carried causal stream buffer.
      spatial_padding: (pad_h, pad_w); temporal padding is 0 (causal buffer).
      compute_dtype: matmul operand dtype (bf16 by default, f32 accumulate).

    Returns:
      (y, new_activation) with y: (N, C_out, T_out, H_out, W_out).
    """
    n, c_in, t, h, w = x.shape
    c_out, c_in_w, kt, kh, kw = weight.shape
    assert c_in_w == c_in
    ph, pw = spatial_padding
    dim_pad = kt - 1

    # --- CausalModule stream buffer (ConvBlock3D._cat_stream_buffer) ---
    if dim_pad > 0:
        if activation is None:
            activation = jnp.zeros((n, c_in, dim_pad, h, w), x.dtype)
        x_cat = jnp.concatenate([activation.astype(x.dtype), x], axis=2)
        new_activation = x_cat[:, :, -dim_pad:]
    else:
        x_cat, new_activation = x, activation

    t_c = t + dim_pad
    h_p, w_p = h + 2 * ph, w + 2 * pw
    t_out, h_out, w_out = t_c - kt + 1, h_p - kh + 1, w_p - kw + 1
    s_frame, s_row = h_p * w_p, w_p

    # Flat lane-axis geometry: (T, H_p, W_p) flattened onto lanes; tiles of
    # l_tile lanes (multiple of 128, >= largest tap offset so one halo chunk
    # suffices).
    l_out = t_out * s_frame
    max_off = (kt - 1) * s_frame + (kh - 1) * s_row + (kw - 1)
    l_tile = _round_up(max(l_tile_min, max_off + 1), 128)
    nj = pl.cdiv(l_out, l_tile)
    l_pad = (nj + 1) * l_tile          # +1 halo-only chunk for the last tile

    # --- layout plumbing (wrapper-side; the kernel sees lane-dense slabs) ---
    x_sp = jnp.pad(x_cat, ((0, 0), (0, 0), (0, 0), (ph, ph), (pw, pw)))
    x_flat = x_sp.reshape(n, c_in, t_c * s_frame).astype(compute_dtype)
    x_flat = jnp.pad(x_flat, ((0, 0), (0, 0), (0, l_pad - t_c * s_frame)))

    # weights -> (C_out, K_pad): taps flattened onto the lane (contraction)
    # axis in the same order the kernel fills the im2col scratch, K padded to
    # a multiple of 128 for lane-dense MXU pushes.
    k = kt * kh * kw * c_in
    k_pad = _round_up(k, 128)
    w_fused = jnp.transpose(weight, (0, 2, 3, 4, 1)).reshape(c_out, k)
    w_fused = jnp.pad(w_fused, ((0, 0), (0, k_pad - k))).astype(compute_dtype)

    y_flat = _conv3d_flat(x_flat, w_fused, kt=kt, kh=kh, kw=kw,
                          s_frame=s_frame, s_row=s_row, l_tile=l_tile,
                          k_pad=k_pad, out_dtype=x.dtype)

    # crop the padded flat output back to (N, C_out, T_out, H_out, W_out).
    y = y_flat[:, :, :l_out].reshape(n, c_out, t_out, h_p, w_p)
    y = y[:, :, :, :h_out, :w_out]
    # TODO(synk): norm_layer/activation_layer are nn.Identity and bias=False in
    # this config; the '2plus1d' two-stage path, tf_like same_padding and
    # stride>1 are not implemented here.
    return y, new_activation


def _reference_forward(x, weight, activation=None, *, spatial_padding=(1, 1),
                       compute_dtype=jnp.bfloat16):
    """Pure-JAX reference mirroring the PyTorch forward (causal '3d' branch).

    Inputs are rounded to `compute_dtype` (matching the kernel's operand
    precision) and accumulated in f32.
    """
    n, c_in, t, h, w = x.shape
    c_out, _, kt, kh, kw = weight.shape
    ph, pw = spatial_padding
    dim_pad = kt - 1
    if dim_pad > 0:
        if activation is None:
            activation = jnp.zeros((n, c_in, dim_pad, h, w), x.dtype)
        x_cat = jnp.concatenate([activation.astype(x.dtype), x], axis=2)
        new_activation = x_cat[:, :, -dim_pad:]
    else:
        x_cat, new_activation = x, activation
    xr = x_cat.astype(compute_dtype).astype(jnp.float32)
    wr = weight.astype(compute_dtype).astype(jnp.float32)
    y = lax.conv_general_dilated(
        xr, wr, window_strides=(1, 1, 1),
        padding=[(0, 0), (ph, ph), (pw, pw)],
        dimension_numbers=("NCDHW", "OIDHW", "NCDHW"),
        precision=lax.Precision.HIGHEST)
    return y.astype(x.dtype), new_activation


if __name__ == "__main__":
    key = jax.random.PRNGKey(0)
    N, C_in, C_out, T, H, W = 2, 4, 8, 8, 8, 8
    KT, KH, KW = 3, 3, 3
    k1, k2, k3 = jax.random.split(key, 3)
    x1 = jax.random.normal(k1, (N, C_in, T, H, W), dtype=jnp.float32)
    x2 = jax.random.normal(k2, (N, C_in, T, H, W), dtype=jnp.float32)
    wgt = 0.1 * jax.random.normal(k3, (C_out, C_in, KT, KH, KW), dtype=jnp.float32)

    # First call: activation is None -> zero stream buffer.
    y1, act1 = conv_block_3d_forward(x1, wgt, activation=None)
    y1 = jax.block_until_ready(y1)
    ry1, ract1 = _reference_forward(x1, wgt, None)
    assert y1.shape == ry1.shape, (y1.shape, ry1.shape)
    assert jnp.allclose(y1, ry1, atol=5e-3, rtol=5e-3), float(jnp.max(jnp.abs(y1 - ry1)))
    assert jnp.allclose(act1, ract1)

    # Second call reuses the carried activation buffer (causal streaming).
    y2, act2 = conv_block_3d_forward(x2, wgt, activation=act1)
    y2 = jax.block_until_ready(y2)
    ry2, ract2 = _reference_forward(x2, wgt, ract1)
    assert jnp.allclose(y2, ry2, atol=5e-3, rtol=5e-3), float(jnp.max(jnp.abs(y2 - ry2)))
    assert jnp.allclose(act2, ract2)

    print("KERNEL_OK")
</pallas_src>

<mosaic_0001>
module attributes {stable_mosaic.version = 11 : i64} {
  func.func @_conv3d_im2col_kernel(%arg0: i32, %arg1: i32, %arg2: memref<1x4x512xbf16, #tpu.memory_space<vmem>>, %arg3: memref<1x4x512xbf16, #tpu.memory_space<vmem>>, %arg4: memref<8x128xbf16, #tpu.memory_space<vmem>>, %arg5: memref<1x8x512xf32, #tpu.memory_space<vmem>>, %arg6: memref<128x512xbf16, #tpu.memory_space<vmem>>) attributes {dimension_semantics = [#tpu.dimension_semantics<parallel>, #tpu.dimension_semantics<parallel>], iteration_bounds = array<i64: 2, 2>, scalar_prefetch = 0 : i64, scratch_operands = 1 : i64, tpu.core_type = #tpu.core_type<tc>, window_params = [{transform_indices = @transform_0, window_bounds = array<i64: 1, 4, 512>}, {transform_indices = @transform_1, window_bounds = array<i64: 1, 4, 512>}, {pipeline_mode = #tpu.pipeline_mode<synchronous>, transform_indices = @transform_2, window_bounds = array<i64: 8, 128>}, {transform_indices = @transform_3, window_bounds = array<i64: 1, 8, 512>}]} {
    %c0 = arith.constant 0 : index
    %c0_0 = arith.constant 0 : index
    %c0_1 = arith.constant 0 : index
    %0 = vector.load %arg2[%c0, %c0_0, %c0_1] : memref<1x4x512xbf16, #tpu.memory_space<vmem>>, vector<1x4x512xbf16>
    %1 = vector.shape_cast %0 : vector<1x4x512xbf16> to vector<4x512xbf16>
    %c0_2 = arith.constant 0 : index
    %c0_3 = arith.constant 0 : index
    %2 = vector.load %arg6[%c0_2, %c0_3] : memref<128x512xbf16, #tpu.memory_space<vmem>>, vector<4x512xbf16>
    tpu.vector_store %arg6[%c0_2, %c0_3], %1 {strides = array<i32>} : memref<128x512xbf16, #tpu.memory_space<vmem>>, vector<4x512xbf16>,
    %c0_4 = arith.constant 0 : index
    %c0_5 = arith.constant 0 : index
    %c1 = arith.constant 1 : index
    %3 = vector.load %arg2[%c0_4, %c0_5, %c1] : memref<1x4x512xbf16, #tpu.memory_space<vmem>>, vector<1x4x511xbf16>
    %4 = vector.shape_cast %3 : vector<1x4x511xbf16> to vector<4x511xbf16>
    %c4 = arith.constant 4 : index
    %c0_6 = arith.constant 0 : index
    %5 = vector.load %arg6[%c4, %c0_6] : memref<128x512xbf16, #tpu.memory_space<vmem>>, vector<4x511xbf16>
    tpu.vector_store %arg6[%c4, %c0_6], %4 {strides = array<i32>} : memref<128x512xbf16, #tpu.memory_space<vmem>>, vector<4x511xbf16>,
    %c0_7 = arith.constant 0 : index
    %c0_8 = arith.constant 0 : index
    %c0_9 = arith.constant 0 : index
    %6 = vector.load %arg3[%c0_7, %c0_8, %c0_9] : memref<1x4x512xbf16, #tpu.memory_space<vmem>>, vector<1x4x1xbf16>
    %7 = vector.shape_cast %6 : vector<1x4x1xbf16> to vector<4x1xbf16>
    %c4_10 = arith.constant 4 : index
    %c511 = arith.constant 511 : index
    %8 = vector.load %arg6[%c4_10, %c511] : memref<128x512xbf16, #tpu.memory_space<vmem>>, vector<4x1xbf16>
    tpu.vector_store %arg6[%c4_10, %c511], %7 {strides = array<i32>} : memref<128x512xbf16, #tpu.memory_space<vmem>>, vector<4x1xbf16>,
    %c0_11 = arith.constant 0 : index
    %c0_12 = arith.constant 0 : index
    %c2 = arith.constant 2 : index
    %9 = vector.load %arg2[%c0_11, %c0_12, %c2] : memref<1x4x512xbf16, #tpu.memory_space<vmem>>, vector<1x4x510xbf16>
    %10 = vector.shape_cast %9 : vector<1x4x510xbf16> to vector<4x510xbf16>
    %c8 = arith.constant 8 : index
    %c0_13 = arith.constant 0 : index
    %11 = vector.load %arg6[%c8, %c0_13] : memref<128x512xbf16, #tpu.memory_space<vmem>>, vector<4x510xbf16>
    tpu.vector_store %arg6[%c8, %c0_13], %10 {strides = array<i32>} : memref<128x512xbf16, #tpu.memory_space<vmem>>, vector<4x510xbf16>,
    %c0_14 = arith.constant 0 : index
    %c0_15 = arith.constant 0 : index
    %c0_16 = arith.constant 0 : index
    %12 = vector.load %arg3[%c0_14, %c0_15, %c0_16] : memref<1x4x512xbf16, #tpu.memory_space<vmem>>, vector<1x4x2xbf16>
    %13 = vector.shape_cast %12 : vector<1x4x2xbf16> to vector<4x2xbf16>
    %c8_17 = arith.constant 8 : index
    %c510 = arith.constant 510 : index
    %14 = vector.load %arg6[%c8_17, %c510] : memref<128x512xbf16, #tpu.memory_space<vmem>>, vector<4x2xbf16>
    tpu.vector_store %arg6[%c8_17, %c510], %13 {strides = array<i32>} : memref<128x512xbf16, #tpu.memory_space<vmem>>, vector<4x2xbf16>,
    %c0_18 = arith.constant 0 : index
    %c0_19 = arith.constant 0 : index
    %c10 = arith.constant 10 : index
    %15 = vector.load %arg2[%c0_18, %c0_19, %c10] : memref<1x4x512xbf16, #tpu.memory_space<vmem>>, vector<1x4x502xbf16>
    %16 = vector.shape_cast %15 : vector<1x4x502xbf16> to vector<4x502xbf16>
    %c12 = arith.constant 12 : index
    %c0_20 = arith.constant 0 : index
    %17 = vector.load %arg6[%c12, %c0_20] : memref<128x512xbf16, #tpu.memory_space<vmem>>, vector<4x502xbf16>
    tpu.vector_store %arg6[%c12, %c0_20], %16 {strides = array<i32>} : memref<128x512xbf16, #tpu.memory_space<vmem>>, vector<4x502xbf16>,
    %c0_21 = arith.constant 0 : index
    %c0_22 = arith.constant 0 : index
    %c0_23 = arith.constant 0 : index
    %18 = vector.load %arg3[%c0_21, %c0_22, %c0_23] : memref<1x4x512xbf16, #tpu.memory_space<vmem>>, vector<1x4x10xbf16>
    %19 = vector.shape_cast %18 : vector<1x4x10xbf16> to vector<4x10xbf16>
    %c12_24 = arith.constant 12 : index
    %c502 = arith.constant 502 : index
    %20 = vector.load %arg6[%c12_24, %c502] : memref<128x512xbf16, #tpu.memory_space<vmem>>, vector<4x10xbf16>
    tpu.vector_store %arg6[%c12_24, %c502], %19 {strides = array<i32>} : memref<128x512xbf16, #tpu.memory_space<vmem>>, vector<4x10xbf16>,
    %c0_25 = arith.constant 0 : index
    %c0_26 = arith.constant 0 : index
    %c11 = arith.constant 11 : index
    %21 = vector.load %arg2[%c0_25, %c0_26, %c11] : memref<1x4x512xbf16, #tpu.memory_space<vmem>>, vector<1x4x501xbf16>
    %22 = vector.shape_cast %21 : vector<1x4x501xbf16> to vector<4x501xbf16>
    %c16 = arith.constant 16 : index
    %c0_27 = arith.constant 0 : index
    %23 = vector.load %arg6[%c16, %c0_27] : memref<128x512xbf16, #tpu.memory_space<vmem>>, vector<4x501xbf16>
    tpu.vector_store %arg6[%c16, %c0_27], %22 {strides = array<i32>} : memref<128x512xbf16, #tpu.memory_space<vmem>>, vector<4x501xbf16>,
    %c0_28 = arith.constant 0 : index
    %c0_29 = arith.constant 0 : index
    %c0_30 = arith.constant 0 : index
    %24 = vector.load %arg3[%c0_28, %c0_29, %c0_30] : memref<1x4x512xbf16, #tpu.memory_space<vmem>>, vector<1x4x11xbf16>
    %25 = vector.shape_cast %24 : vector<1x4x11xbf16> to vector<4x11xbf16>
    %c16_31 = arith.constant 16 : index
    %c501 = arith.constant 501 : index
    %26 = vector.load %arg6[%c16_31, %c501] : memref<128x512xbf16, #tpu.memory_space<vmem>>, vector<4x11xbf16>
    tpu.vector_store %arg6[%c16_31, %c501], %25 {strides = array<i32>} : memref<128x512xbf16, #tpu.memory_space<vmem>>, vector<4x11xbf16>,
    %c0_32 = arith.constant 0 : index
    %c0_33 = arith.constant 0 : index
    %c12_34 = arith.constant 12 : index
    %27 = vector.load %arg2[%c0_32, %c0_33, %c12_34] : memref<1x4x512xbf16, #tpu.memory_space<vmem>>, vector<1x4x500xbf16>
    %28 = vector.shape_cast %27 : vector<1x4x500xbf16> to vector<4x500xbf16>
    %c20 = arith.constant 20 : index
    %c0_35 = arith.constant 0 : index
    %29 = vector.load %arg6[%c20, %c0_35] : memref<128x512xbf16, #tpu.memory_space<vmem>>, vector<4x500xbf16>
    tpu.vector_store %arg6[%c20, %c0_35], %28 {strides = array<i32>} : memref<128x512xbf16, #tpu.memory_space<vmem>>, vector<4x500xbf16>,
    %c0_36 = arith.constant 0 : index
    %c0_37 = arith.constant 0 : index
    %c0_38 = arith.constant 0 : index
    %30 = vector.load %arg3[%c0_36, %c0_37, %c0_38] : memref<1x4x512xbf16, #tpu.memory_space<vmem>>, vector<1x4x12xbf16>
    %31 = vector.shape_cast %30 : vector<1x4x12xbf16> to vector<4x12xbf16>
    %c20_39 = arith.constant 20 : index
    %c500 = arith.constant 500 : index
    %32 = vector.load %arg6[%c20_39, %c500] : memref<128x512xbf16, #tpu.memory_space<vmem>>, vector<4x12xbf16>
    tpu.vector_store %arg6[%c20_39, %c500], %31 {strides = array<i32>} : memref<128x512xbf16, #tpu.memory_space<vmem>>, vector<4x12xbf16>,
    %c0_40 = arith.constant 0 : index
    %c0_41 = arith.constant 0 : index
    %c20_42 = arith.constant 20 : index
    %33 = vector.load %arg2[%c0_40, %c0_41, %c20_42] : memref<1x4x512xbf16, #tpu.memory_space<vmem>>, vector<1x4x492xbf16>
    %34 = vector.shape_cast %33 : vector<1x4x492xbf16> to vector<4x492xbf16>
    %c24 = arith.constant 24 : index
    %c0_43 = arith.constant 0 : index
    %35 = vector.load %arg6[%c24, %c0_43] : memref<128x512xbf16, #tpu.memory_space<vmem>>, vector<4x492xbf16>
    tpu.vector_store %arg6[%c24, %c0_43], %34 {strides = array<i32>} : memref<128x512xbf16, #tpu.memory_space<vmem>>, vector<4x492xbf16>,
    %c0_44 = arith.constant 0 : index
    %c0_45 = arith.constant 0 : index
    %c0_46 = arith.constant 0 : index
    %36 = vector.load %arg3[%c0_44, %c0_45, %c0_46] : memref<1x4x512xbf16, #tpu.memory_space<vmem>>, vector<1x4x20xbf16>
    %37 = vector.shape_cast %36 : vector<1x4x20xbf16> to vector<4x20xbf16>
    %c24_47 = arith.constant 24 : index
    %c492 = arith.constant 492 : index
    %38 = vector.load %arg6[%c24_47, %c492] : memref<128x512xbf16, #tpu.memory_space<vmem>>, vector<4x20xbf16>
    tpu.vector_store %arg6[%c24_47, %c492], %37 {strides = array<i32>} : memref<128x512xbf16, #tpu.memory_space<vmem>>, vector<4x20xbf16>,
    %c0_48 = arith.constant 0 : index
    %c0_49 = arith.constant 0 : index
    %c21 = arith.constant 21 : index
    %39 = vector.load %arg2[%c0_48, %c0_49, %c21] : memref<1x4x512xbf16, #tpu.memory_space<vmem>>, vector<1x4x491xbf16>
    %40 = vector.shape_cast %39 : vector<1x4x491xbf16> to vector<4x491xbf16>
    %c28 = arith.constant 28 : index
    %c0_50 = arith.constant 0 : index
    %41 = vector.load %arg6[%c28, %c0_50] : memref<128x512xbf16, #tpu.memory_space<vmem>>, vector<4x491xbf16>
    tpu.vector_store %arg6[%c28, %c0_50], %40 {strides = array<i32>} : memref<128x512xbf16, #tpu.memory_space<vmem>>, vector<4x491xbf16>,
    %c0_51 = arith.constant 0 : index
    %c0_52 = arith.constant 0 : index
    %c0_53 = arith.constant 0 : index
    %42 = vector.load %arg3[%c0_51, %c0_52, %c0_53] : memref<1x4x512xbf16, #tpu.memory_space<vmem>>, vector<1x4x21xbf16>
    %43 = vector.shape_cast %42 : vector<1x4x21xbf16> to vector<4x21xbf16>
    %c28_54 = arith.constant 28 : index
    %c491 = arith.constant 491 : index
    %44 = vector.load %arg6[%c28_54, %c491] : memref<128x512xbf16, #tpu.memory_space<vmem>>, vector<4x21xbf16>
    tpu.vector_store %arg6[%c28_54, %c491], %43 {strides = array<i32>} : memref<128x512xbf16, #tpu.memory_space<vmem>>, vector<4x21xbf16>,
    %c0_55 = arith.constant 0 : index
    %c0_56 = arith.constant 0 : index
    %c22 = arith.constant 22 : index
    %45 = vector.load %arg2[%c0_55, %c0_56, %c22] : memref<1x4x512xbf16, #tpu.memory_space<vmem>>, vector<1x4x490xbf16>
    %46 = vector.shape_cast %45 : vector<1x4x490xbf16> to vector<4x490xbf16>
    %c32 = arith.constant 32 : index
    %c0_57 = arith.constant 0 : index
    %47 = vector.load %arg6[%c32, %c0_57] : memref<128x512xbf16, #tpu.memory_space<vmem>>, vector<4x490xbf16>
    tpu.vector_store %arg6[%c32, %c0_57], %46 {strides = array<i32>} : memref<128x512xbf16, #tpu.memory_space<vmem>>, vector<4x490xbf16>,
    %c0_58 = arith.constant 0 : index
    %c0_59 = arith.constant 0 : index
    %c0_60 = arith.constant 0 : index
    %48 = vector.load %arg3[%c0_58, %c0_59, %c0_60] : memref<1x4x512xbf16, #tpu.memory_space<vmem>>, vector<1x4x22xbf16>
    %49 = vector.shape_cast %48 : vector<1x4x22xbf16> to vector<4x22xbf16>
    %c32_61 = arith.constant 32 : index
    %c490 = arith.constant 490 : index
    %50 = vector.load %arg6[%c32_61, %c490] : memref<128x512xbf16, #tpu.memory_space<vmem>>, vector<4x22xbf16>
    tpu.vector_store %arg6[%c32_61, %c490], %49 {strides = array<i32>} : memref<128x512xbf16, #tpu.memory_space<vmem>>, vector<4x22xbf16>,
    %c0_62 = arith.constant 0 : index
    %c0_63 = arith.constant 0 : index
    %c100 = arith.constant 100 : index
    %51 = vector.load %arg2[%c0_62, %c0_63, %c100] : memref<1x4x512xbf16, #tpu.memory_space<vmem>>, vector<1x4x412xbf16>
    %52 = vector.shape_cast %51 : vector<1x4x412xbf16> to vector<4x412xbf16>
    %c36 = arith.constant 36 : index
    %c0_64 = arith.constant 0 : index
    %53 = vector.load %arg6[%c36, %c0_64] : memref<128x512xbf16, #tpu.memory_space<vmem>>, vector<4x412xbf16>
    tpu.vector_store %arg6[%c36, %c0_64], %52 {strides = array<i32>} : memref<128x512xbf16, #tpu.memory_space<vmem>>, vector<4x412xbf16>,
    %c0_65 = arith.constant 0 : index
    %c0_66 = arith.constant 0 : index
    %c0_67 = arith.constant 0 : index
    %54 = vector.load %arg3[%c0_65, %c0_66, %c0_67] : memref<1x4x512xbf16, #tpu.memory_space<vmem>>, vector<1x4x100xbf16>
    %55 = vector.shape_cast %54 : vector<1x4x100xbf16> to vector<4x100xbf16>
    %c36_68 = arith.constant 36 : index
    %c412 = arith.constant 412 : index
    %56 = vector.load %arg6[%c36_68, %c412] : memref<128x512xbf16, #tpu.memory_space<vmem>>, vector<4x100xbf16>
    tpu.vector_store %arg6[%c36_68, %c412], %55 {strides = array<i32>} : memref<128x512xbf16, #tpu.memory_space<vmem>>, vector<4x100xbf16>,
    %c0_69 = arith.constant 0 : index
    %c0_70 = arith.constant 0 : index
    %c101 = arith.constant 101 : index
    %57 = vector.load %arg2[%c0_69, %c0_70, %c101] : memref<1x4x512xbf16, #tpu.memory_space<vmem>>, vector<1x4x411xbf16>
    %58 = vector.shape_cast %57 : vector<1x4x411xbf16> to vector<4x411xbf16>
    %c40 = arith.constant 40 : index
    %c0_71 = arith.constant 0 : index
    %59 = vector.load %arg6[%c40, %c0_71] : memref<128x512xbf16, #tpu.memory_space<vmem>>, vector<4x411xbf16>
    tpu.vector_store %arg6[%c40, %c0_71], %58 {strides = array<i32>} : memref<128x512xbf16, #tpu.memory_space<vmem>>, vector<4x411xbf16>,
    %c0_72 = arith.constant 0 : index
    %c0_73 = arith.constant 0 : index
    %c0_74 = arith.constant 0 : index
    %60 = vector.load %arg3[%c0_72, %c0_73, %c0_74] : memref<1x4x512xbf16, #tpu.memory_space<vmem>>, vector<1x4x101xbf16>
    %61 = vector.shape_cast %60 : vector<1x4x101xbf16> to vector<4x101xbf16>
    %c40_75 = arith.constant 40 : index
    %c411 = arith.constant 411 : index
    %62 = vector.load %arg6[%c40_75, %c411] : memref<128x512xbf16, #tpu.memory_space<vmem>>, vector<4x101xbf16>
    tpu.vector_store %arg6[%c40_75, %c411], %61 {strides = array<i32>} : memref<128x512xbf16, #tpu.memory_space<vmem>>, vector<4x101xbf16>,
    %c0_76 = arith.constant 0 : index
    %c0_77 = arith.constant 0 : index
    %c102 = arith.constant 102 : index
    %63 = vector.load %arg2[%c0_76, %c0_77, %c102] : memref<1x4x512xbf16, #tpu.memory_space<vmem>>, vector<1x4x410xbf16>
    %64 = vector.shape_cast %63 : vector<1x4x410xbf16> to vector<4x410xbf16>
    %c44 = arith.constant 44 : index
    %c0_78 = arith.constant 0 : index
    %65 = vector.load %arg6[%c44, %c0_78] : memref<128x512xbf16, #tpu.memory_space<vmem>>, vector<4x410xbf16>
    tpu.vector_store %arg6[%c44, %c0_78], %64 {strides = array<i32>} : memref<128x512xbf16, #tpu.memory_space<vmem>>, vector<4x410xbf16>,
    %c0_79 = arith.constant 0 : index
    %c0_80 = arith.constant 0 : index
    %c0_81 = arith.constant 0 : index
    %66 = vector.load %arg3[%c0_79, %c0_80, %c0_81] : memref<1x4x512xbf16, #tpu.memory_space<vmem>>, vector<1x4x102xbf16>
    %67 = vector.shape_cast %66 : vector<1x4x102xbf16> to vector<4x102xbf16>
    %c44_82 = arith.constant 44 : index
    %c410 = arith.constant 410 : index
    %68 = vector.load %arg6[%c44_82, %c410] : memref<128x512xbf16, #tpu.memory_space<vmem>>, vector<4x102xbf16>
    tpu.vector_store %arg6[%c44_82, %c410], %67 {strides = array<i32>} : memref<128x512xbf16, #tpu.memory_space<vmem>>, vector<4x102xbf16>,
    %c0_83 = arith.constant 0 : index
    %c0_84 = arith.constant 0 : index
    %c110 = arith.constant 110 : index
    %69 = vector.load %arg2[%c0_83, %c0_84, %c110] : memref<1x4x512xbf16, #tpu.memory_space<vmem>>, vector<1x4x402xbf16>
    %70 = vector.shape_cast %69 : vector<1x4x402xbf16> to vector<4x402xbf16>
    %c48 = arith.constant 48 : index
    %c0_85 = arith.constant 0 : index
    %71 = vector.load %arg6[%c48, %c0_85] : memref<128x512xbf16, #tpu.memory_space<vmem>>, vector<4x402xbf16>
    tpu.vector_store %arg6[%c48, %c0_85], %70 {strides = array<i32>} : memref<128x512xbf16, #tpu.memory_space<vmem>>, vector<4x402xbf16>,
    %c0_86 = arith.constant 0 : index
    %c0_87 = arith.constant 0 : index
    %c0_88 = arith.constant 0 : index
    %72 = vector.load %arg3[%c0_86, %c0_87, %c0_88] : memref<1x4x512xbf16, #tpu.memory_space<vmem>>, vector<1x4x110xbf16>
    %73 = vector.shape_cast %72 : vector<1x4x110xbf16> to vector<4x110xbf16>
    %c48_89 = arith.constant 48 : index
    %c402 = arith.constant 402 : index
    %74 = vector.load %arg6[%c48_89, %c402] : memref<128x512xbf16, #tpu.memory_space<vmem>>, vector<4x110xbf16>
    tpu.vector_store %arg6[%c48_89, %c402], %73 {strides = array<i32>} : memref<128x512xbf16, #tpu.memory_space<vmem>>, vector<4x110xbf16>,
    %c0_90 = arith.constant 0 : index
    %c0_91 = arith.constant 0 : index
    %c111 = arith.constant 111 : index
    %75 = vector.load %arg2[%c0_90, %c0_91, %c111] : memref<1x4x512xbf16, #tpu.memory_space<vmem>>, vector<1x4x401xbf16>
    %76 = vector.shape_cast %75 : vector<1x4x401xbf16> to vector<4x401xbf16>
    %c52 = arith.constant 52 : index
    %c0_92 = arith.constant 0 : index
    %77 = vector.load %arg6[%c52, %c0_92] : memref<128x512xbf16, #tpu.memory_space<vmem>>, vector<4x401xbf16>
    tpu.vector_store %arg6[%c52, %c0_92], %76 {strides = array<i32>} : memref<128x512xbf16, #tpu.memory_space<vmem>>, vector<4x401xbf16>,
    %c0_93 = arith.constant 0 : index
    %c0_94 = arith.constant 0 : index
    %c0_95 = arith.constant 0 : index
    %78 = vector.load %arg3[%c0_93, %c0_94, %c0_95] : memref<1x4x512xbf16, #tpu.memory_space<vmem>>, vector<1x4x111xbf16>
    %79 = vector.shape_cast %78 : vector<1x4x111xbf16> to vector<4x111xbf16>
    %c52_96 = arith.constant 52 : index
    %c401 = arith.constant 401 : index
    %80 = vector.load %arg6[%c52_96, %c401] : memref<128x512xbf16, #tpu.memory_space<vmem>>, vector<4x111xbf16>
    tpu.vector_store %arg6[%c52_96, %c401], %79 {strides = array<i32>} : memref<128x512xbf16, #tpu.memory_space<vmem>>, vector<4x111xbf16>,
    %c0_97 = arith.constant 0 : index
    %c0_98 = arith.constant 0 : index
    %c112 = arith.constant 112 : index
    %81 = vector.load %arg2[%c0_97, %c0_98, %c112] : memref<1x4x512xbf16, #tpu.memory_space<vmem>>, vector<1x4x400xbf16>
    %82 = vector.shape_cast %81 : vector<1x4x400xbf16> to vector<4x400xbf16>
    %c56 = arith.constant 56 : index
    %c0_99 = arith.constant 0 : index
    %83 = vector.load %arg6[%c56, %c0_99] : memref<128x512xbf16, #tpu.memory_space<vmem>>, vector<4x400xbf16>
    tpu.vector_store %arg6[%c56, %c0_99], %82 {strides = array<i32>} : memref<128x512xbf16, #tpu.memory_space<vmem>>, vector<4x400xbf16>,
    %c0_100 = arith.constant 0 : index
    %c0_101 = arith.constant 0 : index
    %c0_102 = arith.constant 0 : index
    %84 = vector.load %arg3[%c0_100, %c0_101, %c0_102] : memref<1x4x512xbf16, #tpu.memory_space<vmem>>, vector<1x4x112xbf16>
    %85 = vector.shape_cast %84 : vector<1x4x112xbf16> to vector<4x112xbf16>
    %c56_103 = arith.constant 56 : index
    %c400 = arith.constant 400 : index
    %86 = vector.load %arg6[%c56_103, %c400] : memref<128x512xbf16, #tpu.memory_space<vmem>>, vector<4x112xbf16>
    tpu.vector_store %arg6[%c56_103, %c400], %85 {strides = array<i32>} : memref<128x512xbf16, #tpu.memory_space<vmem>>, vector<4x112xbf16>,
    %c0_104 = arith.constant 0 : index
    %c0_105 = arith.constant 0 : index
    %c120 = arith.constant 120 : index
    %87 = vector.load %arg2[%c0_104, %c0_105, %c120] : memref<1x4x512xbf16, #tpu.memory_space<vmem>>, vector<1x4x392xbf16>
    %88 = vector.shape_cast %87 : vector<1x4x392xbf16> to vector<4x392xbf16>
    %c60 = arith.constant 60 : index
    %c0_106 = arith.constant 0 : index
    %89 = vector.load %arg6[%c60, %c0_106] : memref<128x512xbf16, #tpu.memory_space<vmem>>, vector<4x392xbf16>
    tpu.vector_store %arg6[%c60, %c0_106], %88 {strides = array<i32>} : memref<128x512xbf16, #tpu.memory_space<vmem>>, vector<4x392xbf16>,
    %c0_107 = arith.constant 0 : index
    %c0_108 = arith.constant 0 : index
    %c0_109 = arith.constant 0 : index
    %90 = vector.load %arg3[%c0_107, %c0_108, %c0_109] : memref<1x4x512xbf16, #tpu.memory_space<vmem>>, vector<1x4x120xbf16>
    %91 = vector.shape_cast %90 : vector<1x4x120xbf16> to vector<4x120xbf16>
    %c60_110 = arith.constant 60 : index
    %c392 = arith.constant 392 : index
    %92 = vector.load %arg6[%c60_110, %c392] : memref<128x512xbf16, #tpu.memory_space<vmem>>, vector<4x120xbf16>
    tpu.vector_store %arg6[%c60_110, %c392], %91 {strides = array<i32>} : memref<128x512xbf16, #tpu.memory_space<vmem>>, vector<4x120xbf16>,
    %c0_111 = arith.constant 0 : index
    %c0_112 = arith.constant 0 : index
    %c121 = arith.constant 121 : index
    %93 = vector.load %arg2[%c0_111, %c0_112, %c121] : memref<1x4x512xbf16, #tpu.memory_space<vmem>>, vector<1x4x391xbf16>
    %94 = vector.shape_cast %93 : vector<1x4x391xbf16> to vector<4x391xbf16>
    %c64 = arith.constant 64 : index
    %c0_113 = arith.constant 0 : index
    %95 = vector.load %arg6[%c64, %c0_113] : memref<128x512xbf16, #tpu.memory_space<vmem>>, vector<4x391xbf16>
    tpu.vector_store %arg6[%c64, %c0_113], %94 {strides = array<i32>} : memref<128x512xbf16, #tpu.memory_space<vmem>>, vector<4x391xbf16>,
    %c0_114 = arith.constant 0 : index
    %c0_115 = arith.constant 0 : index
    %c0_116 = arith.constant 0 : index
    %96 = vector.load %arg3[%c0_114, %c0_115, %c0_116] : memref<1x4x512xbf16, #tpu.memory_space<vmem>>, vector<1x4x121xbf16>
    %97 = vector.shape_cast %96 : vector<1x4x121xbf16> to vector<4x121xbf16>
    %c64_117 = arith.constant 64 : index
    %c391 = arith.constant 391 : index
    %98 = vector.load %arg6[%c64_117, %c391] : memref<128x512xbf16, #tpu.memory_space<vmem>>, vector<4x121xbf16>
    tpu.vector_store %arg6[%c64_117, %c391], %97 {strides = array<i32>} : memref<128x512xbf16, #tpu.memory_space<vmem>>, vector<4x121xbf16>,
    %c0_118 = arith.constant 0 : index
    %c0_119 = arith.constant 0 : index
    %c122 = arith.constant 122 : index
    %99 = vector.load %arg2[%c0_118, %c0_119, %c122] : memref<1x4x512xbf16, #tpu.memory_space<vmem>>, vector<1x4x390xbf16>
    %100 = vector.shape_cast %99 : vector<1x4x390xbf16> to vector<4x390xbf16>
    %c68 = arith.constant 68 : index
    %c0_120 = arith.constant 0 : index
    %101 = vector.load %arg6[%c68, %c0_120] : memref<128x512xbf16, #tpu.memory_space<vmem>>, vector<4x390xbf16>
    tpu.vector_store %arg6[%c68, %c0_120], %100 {strides = array<i32>} : memref<128x512xbf16, #tpu.memory_space<vmem>>, vector<4x390xbf16>,
    %c0_121 = arith.constant 0 : index
    %c0_122 = arith.constant 0 : index
    %c0_123 = arith.constant 0 : index
    %102 = vector.load %arg3[%c0_121, %c0_122, %c0_123] : memref<1x4x512xbf16, #tpu.memory_space<vmem>>, vector<1x4x122xbf16>
    %103 = vector.shape_cast %102 : vector<1x4x122xbf16> to vector<4x122xbf16>
    %c68_124 = arith.constant 68 : index
    %c390 = arith.constant 390 : index
    %104 = vector.load %arg6[%c68_124, %c390] : memref<128x512xbf16, #tpu.memory_space<vmem>>, vector<4x122xbf16>
    tpu.vector_store %arg6[%c68_124, %c390], %103 {strides = array<i32>} : memref<128x512xbf16, #tpu.memory_space<vmem>>, vector<4x122xbf16>,
    %c0_125 = arith.constant 0 : index
    %c0_126 = arith.constant 0 : index
    %c200 = arith.constant 200 : index
    %105 = vector.load %arg2[%c0_125, %c0_126, %c200] : memref<1x4x512xbf16, #tpu.memory_space<vmem>>, vector<1x4x312xbf16>
    %106 = vector.shape_cast %105 : vector<1x4x312xbf16> to vector<4x312xbf16>
    %c72 = arith.constant 72 : index
    %c0_127 = arith.constant 0 : index
    %107 = vector.load %arg6[%c72, %c0_127] : memref<128x512xbf16, #tpu.memory_space<vmem>>, vector<4x312xbf16>
    tpu.vector_store %arg6[%c72, %c0_127], %106 {strides = array<i32>} : memref<128x512xbf16, #tpu.memory_space<vmem>>, vector<4x312xbf16>,
    %c0_128 = arith.constant 0 : index
    %c0_129 = arith.constant 0 : index
    %c0_130 = arith.constant 0 : index
    %108 = vector.load %arg3[%c0_128, %c0_129, %c0_130] : memref<1x4x512xbf16, #tpu.memory_space<vmem>>, vector<1x4x200xbf16>
    %109 = vector.shape_cast %108 : vector<1x4x200xbf16> to vector<4x200xbf16>
    %c72_131 = arith.constant 72 : index
    %c312 = arith.constant 312 : index
    %110 = vector.load %arg6[%c72_131, %c312] : memref<128x512xbf16, #tpu.memory_space<vmem>>, vector<4x200xbf16>
    tpu.vector_store %arg6[%c72_131, %c312], %109 {strides = array<i32>} : memref<128x512xbf16, #tpu.memory_space<vmem>>, vector<4x200xbf16>,
    %c0_132 = arith.constant 0 : index
    %c0_133 = arith.constant 0 : index
    %c201 = arith.constant 201 : index
    %111 = vector.load %arg2[%c0_132, %c0_133, %c201] : memref<1x4x512xbf16, #tpu.memory_space<vmem>>, vector<1x4x311xbf16>
    %112 = vector.shape_cast %111 : vector<1x4x311xbf16> to vector<4x311xbf16>
    %c76 = arith.constant 76 : index
    %c0_134 = arith.constant 0 : index
    %113 = vector.load %arg6[%c76, %c0_134] : memref<128x512xbf16, #tpu.memory_space<vmem>>, vector<4x311xbf16>
    tpu.vector_store %arg6[%c76, %c0_134], %112 {strides = array<i32>} : memref<128x512xbf16, #tpu.memory_space<vmem>>, vector<4x311xbf16>,
    %c0_135 = arith.constant 0 : index
    %c0_136 = arith.constant 0 : index
    %c0_137 = arith.constant 0 : index
    %114 = vector.load %arg3[%c0_135, %c0_136, %c0_137] : memref<1x4x512xbf16, #tpu.memory_space<vmem>>, vector<1x4x201xbf16>
    %115 = vector.shape_cast %114 : vector<1x4x201xbf16> to vector<4x201xbf16>
    %c76_138 = arith.constant 76 : index
    %c311 = arith.constant 311 : index
    %116 = vector.load %arg6[%c76_138, %c311] : memref<128x512xbf16, #tpu.memory_space<vmem>>, vector<4x201xbf16>
    tpu.vector_store %arg6[%c76_138, %c311], %115 {strides = array<i32>} : memref<128x512xbf16, #tpu.memory_space<vmem>>, vector<4x201xbf16>,
    %c0_139 = arith.constant 0 : index
    %c0_140 = arith.constant 0 : index
    %c202 = arith.constant 202 : index
    %117 = vector.load %arg2[%c0_139, %c0_140, %c202] : memref<1x4x512xbf16, #tpu.memory_space<vmem>>, vector<1x4x310xbf16>
    %118 = vector.shape_cast %117 : vector<1x4x310xbf16> to vector<4x310xbf16>
    %c80 = arith.constant 80 : index
    %c0_141 = arith.constant 0 : index
    %119 = vector.load %arg6[%c80, %c0_141] : memref<128x512xbf16, #tpu.memory_space<vmem>>, vector<4x310xbf16>
    tpu.vector_store %arg6[%c80, %c0_141], %118 {strides = array<i32>} : memref<128x512xbf16, #tpu.memory_space<vmem>>, vector<4x310xbf16>,
    %c0_142 = arith.constant 0 : index
    %c0_143 = arith.constant 0 : index
    %c0_144 = arith.constant 0 : index
    %120 = vector.load %arg3[%c0_142, %c0_143, %c0_144] : memref<1x4x512xbf16, #tpu.memory_space<vmem>>, vector<1x4x202xbf16>
    %121 = vector.shape_cast %120 : vector<1x4x202xbf16> to vector<4x202xbf16>
    %c80_145 = arith.constant 80 : index
    %c310 = arith.constant 310 : index
    %122 = vector.load %arg6[%c80_145, %c310] : memref<128x512xbf16, #tpu.memory_space<vmem>>, vector<4x202xbf16>
    tpu.vector_store %arg6[%c80_145, %c310], %121 {strides = array<i32>} : memref<128x512xbf16, #tpu.memory_space<vmem>>, vector<4x202xbf16>,
    %c0_146 = arith.constant 0 : index
    %c0_147 = arith.constant 0 : index
    %c210 = arith.constant 210 : index
    %123 = vector.load %arg2[%c0_146, %c0_147, %c210] : memref<1x4x512xbf16, #tpu.memory_space<vmem>>, vector<1x4x302xbf16>
    %124 = vector.shape_cast %123 : vector<1x4x302xbf16> to vector<4x302xbf16>
    %c84 = arith.constant 84 : index
    %c0_148 = arith.constant 0 : index
    %125 = vector.load %arg6[%c84, %c0_148] : memref<128x512xbf16, #tpu.memory_space<vmem>>, vector<4x302xbf16>
    tpu.vector_store %arg6[%c84, %c0_148], %124 {strides = array<i32>} : memref<128x512xbf16, #tpu.memory_space<vmem>>, vector<4x302xbf16>,
    %c0_149 = arith.constant 0 : index
    %c0_150 = arith.constant 0 : index
    %c0_151 = arith.constant 0 : index
    %126 = vector.load %arg3[%c0_149, %c0_150, %c0_151] : memref<1x4x512xbf16, #tpu.memory_space<vmem>>, vector<1x4x210xbf16>
    %127 = vector.shape_cast %126 : vector<1x4x210xbf16> to vector<4x210xbf16>
    %c84_152 = arith.constant 84 : index
    %c302 = arith.constant 302 : index
    %128 = vector.load %arg6[%c84_152, %c302] : memref<128x512xbf16, #tpu.memory_space<vmem>>, vector<4x210xbf16>
    tpu.vector_store %arg6[%c84_152, %c302], %127 {strides = array<i32>} : memref<128x512xbf16, #tpu.memory_space<vmem>>, vector<4x210xbf16>,
    %c0_153 = arith.constant 0 : index
    %c0_154 = arith.constant 0 : index
    %c211 = arith.constant 211 : index
    %129 = vector.load %arg2[%c0_153, %c0_154, %c211] : memref<1x4x512xbf16, #tpu.memory_space<vmem>>, vector<1x4x301xbf16>
    %130 = vector.shape_cast %129 : vector<1x4x301xbf16> to vector<4x301xbf16>
    %c88 = arith.constant 88 : index
    %c0_155 = arith.constant 0 : index
    %131 = vector.load %arg6[%c88, %c0_155] : memref<128x512xbf16, #tpu.memory_space<vmem>>, vector<4x301xbf16>
    tpu.vector_store %arg6[%c88, %c0_155], %130 {strides = array<i32>} : memref<128x512xbf16, #tpu.memory_space<vmem>>, vector<4x301xbf16>,
    %c0_156 = arith.constant 0 : index
    %c0_157 = arith.constant 0 : index
    %c0_158 = arith.constant 0 : index
    %132 = vector.load %arg3[%c0_156, %c0_157, %c0_158] : memref<1x4x512xbf16, #tpu.memory_space<vmem>>, vector<1x4x211xbf16>
    %133 = vector.shape_cast %132 : vector<1x4x211xbf16> to vector<4x211xbf16>
    %c88_159 = arith.constant 88 : index
    %c301 = arith.constant 301 : index
    %134 = vector.load %arg6[%c88_159, %c301] : memref<128x512xbf16, #tpu.memory_space<vmem>>, vector<4x211xbf16>
    tpu.vector_store %arg6[%c88_159, %c301], %133 {strides = array<i32>} : memref<128x512xbf16, #tpu.memory_space<vmem>>, vector<4x211xbf16>,
    %c0_160 = arith.constant 0 : index
    %c0_161 = arith.constant 0 : index
    %c212 = arith.constant 212 : index
    %135 = vector.load %arg2[%c0_160, %c0_161, %c212] : memref<1x4x512xbf16, #tpu.memory_space<vmem>>, vector<1x4x300xbf16>
    %136 = vector.shape_cast %135 : vector<1x4x300xbf16> to vector<4x300xbf16>
    %c92 = arith.constant 92 : index
    %c0_162 = arith.constant 0 : index
    %137 = vector.load %arg6[%c92, %c0_162] : memref<128x512xbf16, #tpu.memory_space<vmem>>, vector<4x300xbf16>
    tpu.vector_store %arg6[%c92, %c0_162], %136 {strides = array<i32>} : memref<128x512xbf16, #tpu.memory_space<vmem>>, vector<4x300xbf16>,
    %c0_163 = arith.constant 0 : index
    %c0_164 = arith.constant 0 : index
    %c0_165 = arith.constant 0 : index
    %138 = vector.load %arg3[%c0_163, %c0_164, %c0_165] : memref<1x4x512xbf16, #tpu.memory_space<vmem>>, vector<1x4x212xbf16>
    %139 = vector.shape_cast %138 : vector<1x4x212xbf16> to vector<4x212xbf16>
    %c92_166 = arith.constant 92 : index
    %c300 = arith.constant 300 : index
    %140 = vector.load %arg6[%c92_166, %c300] : memref<128x512xbf16, #tpu.memory_space<vmem>>, vector<4x212xbf16>
    tpu.vector_store %arg6[%c92_166, %c300], %139 {strides = array<i32>} : memref<128x512xbf16, #tpu.memory_space<vmem>>, vector<4x212xbf16>,
    %c0_167 = arith.constant 0 : index
    %c0_168 = arith.constant 0 : index
    %c220 = arith.constant 220 : index
    %141 = vector.load %arg2[%c0_167, %c0_168, %c220] : memref<1x4x512xbf16, #tpu.memory_space<vmem>>, vector<1x4x292xbf16>
    %142 = vector.shape_cast %141 : vector<1x4x292xbf16> to vector<4x292xbf16>
    %c96 = arith.constant 96 : index
    %c0_169 = arith.constant 0 : index
    %143 = vector.load %arg6[%c96, %c0_169] : memref<128x512xbf16, #tpu.memory_space<vmem>>, vector<4x292xbf16>
    tpu.vector_store %arg6[%c96, %c0_169], %142 {strides = array<i32>} : memref<128x512xbf16, #tpu.memory_space<vmem>>, vector<4x292xbf16>,
    %c0_170 = arith.constant 0 : index
    %c0_171 = arith.constant 0 : index
    %c0_172 = arith.constant 0 : index
    %144 = vector.load %arg3[%c0_170, %c0_171, %c0_172] : memref<1x4x512xbf16, #tpu.memory_space<vmem>>, vector<1x4x220xbf16>
    %145 = vector.shape_cast %144 : vector<1x4x220xbf16> to vector<4x220xbf16>
    %c96_173 = arith.constant 96 : index
    %c292 = arith.constant 292 : index
    %146 = vector.load %arg6[%c96_173, %c292] : memref<128x512xbf16, #tpu.memory_space<vmem>>, vector<4x220xbf16>
    tpu.vector_store %arg6[%c96_173, %c292], %145 {strides = array<i32>} : memref<128x512xbf16, #tpu.memory_space<vmem>>, vector<4x220xbf16>,
    %c0_174 = arith.constant 0 : index
    %c0_175 = arith.constant 0 : index
    %c221 = arith.constant 221 : index
    %147 = vector.load %arg2[%c0_174, %c0_175, %c221] : memref<1x4x512xbf16, #tpu.memory_space<vmem>>, vector<1x4x291xbf16>
    %148 = vector.shape_cast %147 : vector<1x4x291xbf16> to vector<4x291xbf16>
    %c100_176 = arith.constant 100 : index
    %c0_177 = arith.constant 0 : index
    %149 = vector.load %arg6[%c100_176, %c0_177] : memref<128x512xbf16, #tpu.memory_space<vmem>>, vector<4x291xbf16>
    tpu.vector_store %arg6[%c100_176, %c0_177], %148 {strides = array<i32>} : memref<128x512xbf16, #tpu.memory_space<vmem>>, vector<4x291xbf16>,
    %c0_178 = arith.constant 0 : index
    %c0_179 = arith.constant 0 : index
    %c0_180 = arith.constant 0 : index
    %150 = vector.load %arg3[%c0_178, %c0_179, %c0_180] : memref<1x4x512xbf16, #tpu.memory_space<vmem>>, vector<1x4x221xbf16>
    %151 = vector.shape_cast %150 : vector<1x4x221xbf16> to vector<4x221xbf16>
    %c100_181 = arith.constant 100 : index
    %c291 = arith.constant 291 : index
    %152 = vector.load %arg6[%c100_181, %c291] : memref<128x512xbf16, #tpu.memory_space<vmem>>, vector<4x221xbf16>
    tpu.vector_store %arg6[%c100_181, %c291], %151 {strides = array<i32>} : memref<128x512xbf16, #tpu.memory_space<vmem>>, vector<4x221xbf16>,
    %c0_182 = arith.constant 0 : index
    %c0_183 = arith.constant 0 : index
    %c222 = arith.constant 222 : index
    %153 = vector.load %arg2[%c0_182, %c0_183, %c222] : memref<1x4x512xbf16, #tpu.memory_space<vmem>>, vector<1x4x290xbf16>
    %154 = vector.shape_cast %153 : vector<1x4x290xbf16> to vector<4x290xbf16>
    %c104 = arith.constant 104 : index
    %c0_184 = arith.constant 0 : index
    %155 = vector.load %arg6[%c104, %c0_184] : memref<128x512xbf16, #tpu.memory_space<vmem>>, vector<4x290xbf16>
    tpu.vector_store %arg6[%c104, %c0_184], %154 {strides = array<i32>} : memref<128x512xbf16, #tpu.memory_space<vmem>>, vector<4x290xbf16>,
    %c0_185 = arith.constant 0 : index
    %c0_186 = arith.constant 0 : index
    %c0_187 = arith.constant 0 : index
    %156 = vector.load %arg3[%c0_185, %c0_186, %c0_187] : memref<1x4x512xbf16, #tpu.memory_space<vmem>>, vector<1x4x222xbf16>
    %157 = vector.shape_cast %156 : vector<1x4x222xbf16> to vector<4x222xbf16>
    %c104_188 = arith.constant 104 : index
    %c290 = arith.constant 290 : index
    %158 = vector.load %arg6[%c104_188, %c290] : memref<128x512xbf16, #tpu.memory_space<vmem>>, vector<4x222xbf16>
    tpu.vector_store %arg6[%c104_188, %c290], %157 {strides = array<i32>} : memref<128x512xbf16, #tpu.memory_space<vmem>>, vector<4x222xbf16>,
    %cst = arith.constant 0.000000e+00 : bf16
    %159 = vector.broadcast %cst : bf16 to vector<20x512xbf16>
    %c108 = arith.constant 108 : index
    %c0_189 = arith.constant 0 : index
    %160 = vector.load %arg6[%c108, %c0_189] : memref<128x512xbf16, #tpu.memory_space<vmem>>, vector<20x512xbf16>
    tpu.vector_store %arg6[%c108, %c0_189], %159 {strides = array<i32>} : memref<128x512xbf16, #tpu.memory_space<vmem>>, vector<20x512xbf16>,
    %c0_190 = arith.constant 0 : index
    %c0_191 = arith.constant 0 : index
    %161 = vector.load %arg4[%c0_190, %c0_191] : memref<8x128xbf16, #tpu.memory_space<vmem>>, vector<8x128xbf16>
    %c0_192 = arith.constant 0 : index
    %c0_193 = arith.constant 0 : index
    %162 = vector.load %arg6[%c0_192, %c0_193] : memref<128x512xbf16, #tpu.memory_space<vmem>>, vector<128x512xbf16>
    %cst_194 = arith.constant dense<0.000000e+00> : vector<8x512xf32>
    %163 = tpu.matmul %161, %162, %cst_194 {dimension_numbers = #tpu.dot_dimension_numbers<[1], [0], [0], [1], [0, 0, 1, 1], [], []>} : vector<8x128xbf16>, vector<128x512xbf16>, vector<8x512xf32> -> vector<8x512xf32>
    %c0_195 = arith.constant 0 : index
    %c0_196 = arith.constant 0 : index
    %c0_197 = arith.constant 0 : index
    %164 = vector.load %arg5[%c0_195, %c0_196, %c0_197] : memref<1x8x512xf32, #tpu.memory_space<vmem>>, vector<1x8x512xf32>
    %165 = vector.shape_cast %164 : vector<1x8x512xf32> to vector<8x512xf32>
    %166 = vector.shape_cast %163 : vector<8x512xf32> to vector<1x8x512xf32>
    tpu.vector_store %arg5[%c0_195, %c0_196, %c0_197], %166 {strides = array<i32>} : memref<1x8x512xf32, #tpu.memory_space<vmem>>, vector<1x8x512xf32>,
    return
  }
  func.func @transform_0(%arg0: i32, %arg1: i32) -> (i32, i32, i32) {
    %c0_i32 = arith.constant 0 : i32
    %c0_i32_0 = arith.constant 0 : i32
    return %arg0, %c0_i32, %arg1 : i32, i32, i32
  }
  func.func @transform_1(%arg0: i32, %arg1: i32) -> (i32, i32, i32) {
    %c1_i32 = arith.constant 1 : i32
    %0 = arith.addi %arg1, %c1_i32 : i32
    %c0_i32 = arith.constant 0 : i32
    %c0_i32_0 = arith.constant 0 : i32
    return %arg0, %c0_i32, %0 : i32, i32, i32
  }
  func.func @transform_2(%arg0: i32, %arg1: i32) -> (i32, i32) {
    %c0_i32 = arith.constant 0 : i32
    %c0_i32_0 = arith.constant 0 : i32
    %c0_i32_1 = arith.constant 0 : i32
    return %c0_i32, %c0_i32_0 : i32, i32
  }
  func.func @transform_3(%arg0: i32, %arg1: i32) -> (i32, i32, i32) {
    %c0_i32 = arith.constant 0 : i32
    %c0_i32_0 = arith.constant 0 : i32
    return %arg0, %c0_i32, %arg1 : i32, i32, i32
  }
}

</mosaic_0001>

<llo_original>
// kernel: _conv3d_flat.1
$region0: #{_conv3d_flat.1}
  #allocation0 [shape = 'u32[]', space=smem, size = 0x4, offset = 0x4, fixed_abs, tag = 'smem constant byte address 0x4 - core index']
  #allocation1 [shape = 'u32[144,128]{1,0:T(1,128)}', space=vmem, size = 0x12000, scoped, tag = 'internal scratch']
  #allocation2 [shape = 'bf16[128,512]{1,0:T(16,128)(2,1)}', space=vmem, size = 0x20000, scoped, tag = 'scratch operand']
  %s0 = inlined_call_operand.hbm [shape: bf16[2,4,1536], index: 0, kind: input, shape index: {}, may-alias: {0,1}]
  %s1 = inlined_call_operand.hbm [shape: bf16[2,4,1536], index: 1, kind: input, shape index: {}, may-alias: {0,1}]
  %s2 = inlined_call_operand.hbm [shape: bf16[8,128], index: 2, kind: input, shape index: {}]
  %s3 = inlined_call_operand.hbm [shape: f32[2,8,1024], index: 3, kind: output, shape index: {}]
  %s4 = sld [smem:[#allocation0]]
  $region57: #{_conv3d_flat.1} parent=0
    _
  %s6 = ssub.s32 1, %s4
  %s7 = scalar_select 0, %s6, %s4
  $region1: #{_conv3d_flat.1} parent=0
    #allocation3 [shape = 'u8[8192]{0}', space=vmem, size = 0x2000, scoped, tag = 'input window, operand 0']
    #allocation4 [shape = 's32[2]{0}', space=sflag, size = 0x8, scoped, tag = 'scoped memory for _conv3d_flat.1']
    #allocation5 [shape = 's32[2]{0}', space=sflag, size = 0x8, scoped, tag = 'scoped memory for _conv3d_flat.1']
    #allocation6 [shape = 'u8[8192]{0}', space=vmem, size = 0x2000, scoped, tag = 'input window, operand 1']
    #allocation7 [shape = 's32[2]{0}', space=sflag, size = 0x8, scoped, tag = 'scoped memory for _conv3d_flat.1']
    #allocation8 [shape = 'u8[2048]{0}', space=vmem, size = 0x800, scoped, tag = 'input window, operand 2, single buffered']
    #allocation9 [shape = 'u8[32768]{0}', space=vmem, size = 0x8000, scoped, tag = 'output window, operand 0']
    %8 = vsyncpa [#allocation4], 0
    %s9 = scalar_lea.sflag [#allocation4], 1
    %10 = vsyncpa %s9, 0
    %11 = vsyncpa [#allocation7], 0
    %s12 = scalar_lea.sflag [#allocation7], 1
    %13 = vsyncpa %s12, 0
    %14 = vsyncpa [#allocation5], 0
    %s15 = scalar_lea.sflag [#allocation5], 1
    %16 = vsyncpa %s15, 0
    loop: start=0, step=1, limit=6
    $region2: #{_conv3d_flat.1} parent=1 // loop_pre_header
      _
    $region3: #{_conv3d_flat.1} parent=1 // loop_header
      %s18 = sphi 0, %s22
      %p19 = scmp.ge.s32.totalorder %s18, 6
      %s25 = sphi 0, %s37
      %s26 = sphi 0, %s33
      %s27 = sphi 0, %s25
      %s28 = sphi 0, %s26
      %s29 = sphi 0, %s27
      %s30 = sphi 0, %s28
      %s42 = sphi 0, %s44
      %s45 = sphi 0, %s42
      %s46 = sphi 0, %s45
      %s62 = sphi 0, %s46
      %s72 = sphi 0, %s74
      %s75 = sphi 0, %s72
      %s76 = sphi 0, %s75
      %s92 = sphi 0, %s76
      %s96 = sphi 0, %s96
      %s98 = sphi 0, %s96
      %s99 = sphi 0, %s98
      %s113 = sphi 0, %s99
      %s121 = sphi 0, %s123
      %s124 = sphi 0, %s121
      %s125 = sphi 0, %s124
      %s141 = sphi 0, %s125
    $region4: #{_conv3d_flat.1} parent=1 // loop_header_branch
      %21 = sbr.rel (%p19) target = $region8
    $region5: #{_conv3d_flat.1} parent=1 // loop_body
      %s23 = ssub.s32 %s18, 1
      %s24 = ssub.s32 %s18, 2
      %s31 = sadd.s32 1, %s26
      %p32 = scmp.ge.s32.totalorder %s31, 2
      %s33 = scalar_select %p32, 0, %s31
      %s34 = sadd.s32 1, %s25
      %s35 = scalar_select %p32, %s34, %s25
      %p36 = scmp.ge.s32.totalorder %s35, 2
      %s37 = scalar_select %p36, 0, %s35
      %s38 = ssub.s32 %s25, %s37
      %s39 = ssub.s32 %s26, %s33
      %s40 = sor.u32 %s38, %s39
      %p41 = scmp.eq.s32.totalorder %s40, 0
      %s43 = sadd.s32 %s42, 1
      %s44 = scalar_select %p41, %s42, %s43
      %p47 = pneg %p41
      %p48 = scmp.eq.s32.totalorder %s18, 3
      %p49 = por %p47, %p48
      %p50 = scmp.ne.s32.totalorder %s42, %s45
      %p51 = scmp.eq.s32.totalorder %s18, 0
      %p52 = por %p50, %p51
      %p53 = scmp.ne.s32.totalorder %s42, %s45
      %p54 = scmp.eq.s32.totalorder %s23, 3
      %p55 = por %p53, %p54
      %p56 = scmp.ne.s32.totalorder %s45, %s46
      %p57 = scmp.eq.s32.totalorder %s23, 0
      %p58 = por %p56, %p57
      %p59 = scmp.ne.s32.totalorder %s45, %s46
      %p60 = scmp.eq.s32.totalorder %s24, 3
      %p61 = por %p59, %p60
      %p63 = scmp.ne.s32.totalorder %s46, %s62
      %p64 = scmp.eq.s32.totalorder %s24, 0
      %p65 = por %p63, %p64
      %s66 = sadd.s32 %s26, 1
      %s67 = sadd.s32 %s33, 1
      %s68 = ssub.s32 %s25, %s37
      %s69 = ssub.s32 %s66, %s67
      %s70 = sor.u32 %s68, %s69
      %p71 = scmp.eq.s32.totalorder %s70, 0
      %s73 = sadd.s32 %s72, 1
      %s74 = scalar_select %p71, %s72, %s73
      %p77 = pneg %p71
      %p78 = scmp.eq.s32.totalorder %s18, 3
      %p79 = por %p77, %p78
      %p80 = scmp.ne.s32.totalorder %s72, %s75
      %p81 = scmp.eq.s32.totalorder %s18, 0
      %p82 = por %p80, %p81
      %p83 = scmp.ne.s32.totalorder %s72, %s75
      %p84 = scmp.eq.s32.totalorder %s23, 3
      %p85 = por %p83, %p84
      %p86 = scmp.ne.s32.totalorder %s75, %s76
      %p87 = scmp.eq.s32.totalorder %s23, 0
      %p88 = por %p86, %p87
      %p89 = scmp.ne.s32.totalorder %s75, %s76
      %p90 = scmp.eq.s32.totalorder %s24, 3
      %p91 = por %p89, %p90
      %p93 = scmp.ne.s32.totalorder %s76, %s92
      %p94 = scmp.eq.s32.totalorder %s24, 0
      %p95 = por %p93, %p94
      %s97 = sadd.s32 %s96, 1
      %p100 = scmp.eq.s32.totalorder %s18, 3
      %p101 = scmp.ne.s32.totalorder %s96, %s98
      %p102 = scmp.eq.s32.totalorder %s18, 0
      %p103 = por %p101, %p102
      %p104 = scmp.ne.s32.totalorder %s96, %s98
      %p105 = scmp.eq.s32.totalorder %s23, 3
      %p106 = por %p104, %p105
      %p107 = scmp.ne.s32.totalorder %s98, %s99
      %p108 = scmp.eq.s32.totalorder %s23, 0
      %p109 = por %p107, %p108
      %p110 = scmp.ne.s32.totalorder %s98, %s99
      %p111 = scmp.eq.s32.totalorder %s24, 3
      %p112 = por %p110, %p111
      %p114 = scmp.ne.s32.totalorder %s99, %s113
      %p115 = scmp.eq.s32.totalorder %s24, 0
      %p116 = por %p114, %p115
      %s117 = ssub.s32 %s25, %s37
      %s118 = ssub.s32 %s26, %s33
      %s119 = sor.u32 %s117, %s118
      %p120 = scmp.eq.s32.totalorder %s119, 0
      %s122 = sadd.s32 %s121, 1
      %s123 = scalar_select %p120, %s121, %s122
      %p126 = pneg %p120
      %p127 = scmp.eq.s32.totalorder %s18, 3
      %p128 = por %p126, %p127
      %p129 = scmp.ne.s32.totalorder %s121, %s124
      %p130 = scmp.eq.s32.totalorder %s18, 0
      %p131 = por %p129, %p130
      %p132 = scmp.ne.s32.totalorder %s121, %s124
      %p133 = scmp.eq.s32.totalorder %s23, 3
      %p134 = por %p132, %p133
      %p135 = scmp.ne.s32.totalorder %s124, %s125
      %p136 = scmp.eq.s32.totalorder %s23, 0
      %p137 = por %p135, %p136
      %p138 = scmp.ne.s32.totalorder %s124, %s125
      %p139 = scmp.eq.s32.totalorder %s24, 3
      %p140 = por %p138, %p139
      %p142 = scmp.ne.s32.totalorder %s125, %s141
      %p143 = scmp.eq.s32.totalorder %s24, 0
      %p144 = por %p142, %p143
      %p145 = scmp.le.s32.totalorder 1, %s18
      %p146 = scmp.lt.s32.totalorder %s18, 5
      %p147 = pnand %p145, %p146
      %p148 = pneg %p147
      // Predicated region
      $region9: #{_conv3d_flat.1} parent=5 // pred_check
        _
      $region10: #{_conv3d_flat.1} parent=5 // pred_check_branch
        %150 = sbr.rel (%p147) target = $region12
      $region11: #{_conv3d_flat.1} parent=5 // pred_region
        %s151 = ssub.s32 %s18, 1
        // Predicated region
        $region13: #{_conv3d_flat.1} parent=11 // pred_check
          %p152 = pneg %p109
        $region14: #{_conv3d_flat.1} parent=11 // pred_check_branch
          %154 = sbr.rel (%p152) target = $region16
        $region15: #{_conv3d_flat.1} parent=11 // pred_region
          %s156 = ssub.s32 64, 64
          %157 = vsyncadd [#allocation7], %s156
          %s159 = sshll.u32 [#allocation8], 4
          %s160 = int_to_ptr.vmem [resolvable:$true] %s159
          %162 = dma.hbm_to_vmem [thread:$0]  %s2, 64, %s160, [#allocation7]
        $region16: #{_conv3d_flat.1} parent=11 // pred_fallthru
          _
      $region12: #{_conv3d_flat.1} parent=5 // pred_fallthru
        _
      %p163 = scmp.lt.s32.totalorder %s18, 4
      // Predicated region
      $region17: #{_conv3d_flat.1} parent=5 // pred_check
        %p164 = pneg %p163
      $region18: #{_conv3d_flat.1} parent=5 // pred_check_branch
        %166 = sbr.rel (%p164) target = $region20
      $region19: #{_conv3d_flat.1} parent=5 // pred_region
        // Predicated region
        $region21: #{_conv3d_flat.1} parent=19 // pred_check
          %p167 = pneg %p52
        $region22: #{_conv3d_flat.1} parent=19 // pred_check_branch
          %169 = sbr.rel (%p167) target = $region24
        $region23: #{_conv3d_flat.1} parent=19 // pred_region
          %s170 = sand.u32 %s42, 1
          %s171 = scalar_lea.sflag [#allocation4], %s170
          %s172 = sand.u32 %s42, 1
          %s173 = smul.addr %s172, 8
          %s174 = scalar_lea.vmem [#allocation3], %s173
          %s175 = smul.u32 4, %s26
          %s177 = ssub.s32 128, 128
          %178 = vsyncadd %s171, %s177
          %s179 = smul.addr %s25, 12
          %s180 = sadd.s32 %s175, %s179
          %s181 = smul.addr %s180, 32
          %s182 = scalar_lea.hbm %s0, %s181
          %s184 = sshll.u32 %s174, 4
          %s185 = int_to_ptr.vmem [resolvable:$true] %s184
          %187 = dma.hbm_to_vmem [thread:$0]  %s182, 128, %s185, %s171
        $region24: #{_conv3d_flat.1} parent=19 // pred_fallthru
          _
        // Predicated region
        $region25: #{_conv3d_flat.1} parent=19 // pred_check
          %p188 = pneg %p82
        $region26: #{_conv3d_flat.1} parent=19 // pred_check_branch
          %190 = sbr.rel (%p188) target = $region28
        $region27: #{_conv3d_flat.1} parent=19 // pred_region
          %s191 = sand.u32 %s18, 1
          %s192 = scalar_lea.sflag [#allocation7], %s191
          %s193 = sand.u32 %s72, 1
          %s194 = smul.addr %s193, 8
          %s195 = scalar_lea.vmem [#allocation6], %s194
          %s196 = sadd.s32 %s26, 1
          %s197 = smul.u32 4, %s196
          %s199 = ssub.s32 128, 128
          %200 = vsyncadd %s192, %s199
          %s201 = smul.addr %s25, 12
          %s202 = sadd.s32 %s197, %s201
          %s203 = smul.addr %s202, 32
          %s204 = scalar_lea.hbm %s1, %s203
          %s206 = sshll.u32 %s195, 4
          %s207 = int_to_ptr.vmem [resolvable:$true] %s206
          %209 = dma.hbm_to_vmem [thread:$0]  %s204, 128, %s207, %s192
        $region28: #{_conv3d_flat.1} parent=19 // pred_fallthru
          _
      $region20: #{_conv3d_flat.1} parent=5 // pred_fallthru
        _
      %p210 = scmp.le.s32.totalorder 1, %s18
      %p211 = scmp.lt.s32.totalorder %s18, 5
      %p212 = pnand %p210, %p211
      %p213 = pneg %p212
      // Predicated region
      $region29: #{_conv3d_flat.1} parent=5 // pred_check
        _
      $region30: #{_conv3d_flat.1} parent=5 // pred_check_branch
        %215 = sbr.rel (%p212) target = $region32
      $region31: #{_conv3d_flat.1} parent=5 // pred_region
        %s216 = ssub.s32 %s18, 1
        %s217 = sand.u32 %s45, 1
        %s218 = scalar_lea.sflag [#allocation4], %s217
        %s219 = sand.u32 %s45, 1
        %s220 = smul.addr %s219, 8
        %s221 = scalar_lea.vmem [#allocation3], %s220
        // Predicated region
        $region33: #{_conv3d_flat.1} parent=31 // pred_check
          %p222 = pneg %p58
        $region34: #{_conv3d_flat.1} parent=31 // pred_check_branch
          %224 = sbr.rel (%p222) target = $region36
        $region35: #{_conv3d_flat.1} parent=31 // pred_region
          %225 = dma.done %s218, 128
        $region36: #{_conv3d_flat.1} parent=31 // pred_fallthru
          _
        %s226 = sand.u32 %s23, 1
        %s227 = scalar_lea.sflag [#allocation7], %s226
        %s228 = sand.u32 %s75, 1
        %s229 = smul.addr %s228, 8
        %s230 = scalar_lea.vmem [#allocation6], %s229
        // Predicated region
        $region37: #{_conv3d_flat.1} parent=31 // pred_check
          %p231 = pneg %p88
        $region38: #{_conv3d_flat.1} parent=31 // pred_check_branch
          %233 = sbr.rel (%p231) target = $region40
        $region39: #{_conv3d_flat.1} parent=31 // pred_region
          %234 = dma.done %s227, 128
        $region40: #{_conv3d_flat.1} parent=31 // pred_fallthru
          _
        // Predicated region
        $region41: #{_conv3d_flat.1} parent=31 // pred_check
          %p235 = pneg %p109
        $region42: #{_conv3d_flat.1} parent=31 // pred_check_branch
          %237 = sbr.rel (%p235) target = $region44
        $region43: #{_conv3d_flat.1} parent=31 // pred_region
          %238 = dma.done [#allocation7], 64
        $region44: #{_conv3d_flat.1} parent=31 // pred_fallthru
          _
        %s239 = sand.u32 %s45, 1
        %s240 = scalar_lea.sflag [#allocation4], %s239
        %s241 = sand.u32 %s45, 1
        %s242 = smul.addr %s241, 8
        %s243 = scalar_lea.vmem [#allocation3], %s242
        %p244 = pneg %p58
        %p245 = pneg %p55
        %s246 = sand.u32 %s23, 1
        %s247 = scalar_lea.sflag [#allocation7], %s246
        %s248 = sand.u32 %s75, 1
        %s249 = smul.addr %s248, 8
        %s250 = scalar_lea.vmem [#allocation6], %s249
        %p251 = pneg %p88
        %p252 = pneg %p85
        %p253 = pneg %p109
        %p254 = pneg %p106
        %p255 = pneg %p137
        %p256 = pneg %p134
        %s257 = sand.u32 %s124, 1
        %s258 = scalar_lea.sflag [#allocation5], %s257
        %s259 = sand.u32 %s124, 1
        %s260 = smul.addr %s259, 32
        %s261 = scalar_lea.vmem [#allocation9], %s260
        %s262 = smul.u32 4, %s28
        %s263 = sadd.s32 %s28, 1
        %s264 = smul.u32 4, %s263
        %s265 = smul.u32 4, %s28
        %v267 = vld [vmem:[%s221] sm:$0xff]
        %v269 = vcombine.high %v267, %v267
        %v271 = vunpack.c.l.s4 1983009808
        %v272 = vunpack.c.0.s8 %v271
        %v273 = vlaneseq
        %v274 = vshrl.u32 %v273, 7
        %v275 = vsub.s32 %v272, %v274
        %v276 = vrot.slane %v267, %v275
        %v278 = vunpack.c.l.s4 1983009808
        %v279 = vunpack.c.0.s8 %v278
        %v280 = vlaneseq
        %v281 = vshrl.u32 %v280, 7
        %v282 = vsub.s32 %v279, %v281
        %v283 = vrot.slane %v269, %v282
        %v284 = vcombine.high %v276, %v276
        %v285 = vcombine.high %v283, %v283
        %290 = vst [vmem:[#allocation2] sm:$0x3] %v276
        %291 = vst [vmem:[#allocation2 + $0x8] sm:$0x3] %v284
        %292 = vst [vmem:[#allocation2 + $0x10] sm:$0x3] %v283
        %293 = vst [vmem:[#allocation2 + $0x18] sm:$0x3] %v285
        %v294 = vld [vmem:[%s221] sm:$0xff]
        %v296 = vcombine.low %v294, %v294
        %v298 = vunpack.c.l.s4 1983009808
        %v299 = vunpack.c.0.s8 %v298
        %v300 = vlaneseq
        %v301 = vshrl.u32 %v300, 7
        %v302 = vsub.s32 %v299, %v301
        %v303 = vrot.slane %v296, %v302
        %v305 = vunpack.c.l.s4 1983009808
        %v306 = vunpack.c.0.s8 %v305
        %v307 = vlaneseq
        %v308 = vshrl.u32 %v307, 7
        %v309 = vsub.s32 %v306, %v308
        %v310 = vrot.slane %v294, %v309
        %v311 = vcombine.high %v303, %v303
        %v312 = vcombine.high %v310, %v310
        %313 = vrot.lane.b32.xlu0 %v303, 127
        %v314 = vpop.permute.xlu0 %313
        %315 = vrot.lane.b32.xlu0 %v311, 127
        %v316 = vpop.permute.xlu0 %315
        %317 = vrot.lane.b32.xlu0 %v310, 127
        %v318 = vpop.permute.xlu0 %317
        %319 = vrot.lane.b32.xlu0 %v312, 127
        %v320 = vpop.permute.xlu0 %319
        %vm321 = vcmask 1039360
        %v322 = vsel %vm321, %v314, %v316
        %v323 = vsel %vm321, %v316, %v318
        %v324 = vsel %vm321, %v318, %v320
        %329 = vst [vmem:[#allocation2] sm:$0xc] %v322
        %330 = vst [vmem:[#allocation2 + $0x8] sm:$0xc] %v323
        %331 = vst [vmem:[#allocation2 + $0x10] sm:$0xc] %v324
        %vm332 = vcmask 1035266
        %333 = vst.msk [vmem:[#allocation2 + $0x18] sm:$0xc] %vm332, %v320
        %v334 = vld [vmem:[%s230] sm:$0x3]
        %v336 = vcombine.low %v334, %v334
        %v338 = vunpack.c.l.s4 1983009808
        %v339 = vunpack.c.0.s8 %v338
        %v340 = vlaneseq
        %v341 = vshrl.u32 %v340, 7
        %v342 = vsub.s32 %v339, %v341
        %v343 = vrot.slane %v336, %v342
        %344 = vrot.lane.b32.xlu0 %v343, 127
        %v345 = vpop.permute.xlu0 %344
        %vm347 = vcmask 1044474
        %348 = vst.msk [vmem:[#allocation2 + $0x18] sm:$0xc] %vm347, %v345
        %v349 = vld [vmem:[%s221] sm:$0xff]
        %v351 = vcombine.high %v349, %v349
        %v353 = vunpack.c.l.s4 1983009808
        %v354 = vunpack.c.0.s8 %v353
        %v355 = vlaneseq
        %v356 = vshrl.u32 %v355, 7
        %v357 = vsub.s32 %v354, %v356
        %v358 = vrot.slane %v349, %v357
        %v360 = vunpack.c.l.s4 1983009808
        %v361 = vunpack.c.0.s8 %v360
        %v362 = vlaneseq
        %v363 = vshrl.u32 %v362, 7
        %v364 = vsub.s32 %v361, %v363
        %v365 = vrot.slane %v351, %v364
        %v366 = vcombine.low %v358, %v358
        %v367 = vcombine.low %v365, %v365
        %368 = vrot.lane.b32.xlu0 %v366, 126
        %v369 = vpop.permute.xlu0 %368
        %370 = vrot.lane.b32.xlu0 %v358, 126
        %v371 = vpop.permute.xlu0 %370
        %372 = vrot.lane.b32.xlu0 %v367, 126
        %v373 = vpop.permute.xlu0 %372
        %374 = vrot.lane.b32.xlu0 %v365, 126
        %v375 = vpop.permute.xlu0 %374
        %vm376 = vcmask 1031168
        %v377 = vsel %vm376, %v369, %v371
        %v378 = vsel %vm376, %v371, %v373
        %v379 = vsel %vm376, %v373, %v375
        %384 = vst [vmem:[#allocation2] sm:$0x30] %v377
        %385 = vst [vmem:[#allocation2 + $0x8] sm:$0x30] %v378
        %386 = vst [vmem:[#allocation2 + $0x10] sm:$0x30] %v379
        %vm387 = vcmask 1029124
        %388 = vst.msk [vmem:[#allocation2 + $0x18] sm:$0x30] %vm387, %v375
        %v389 = vld [vmem:[%s230] sm:$0x3]
        %v392 = vunpack.c.l.s4 1983009808
        %v393 = vunpack.c.0.s8 %v392
        %v394 = vlaneseq
        %v395 = vshrl.u32 %v394, 7
        %v396 = vsub.s32 %v393, %v395
        %v397 = vrot.slane %v389, %v396
        %v398 = vcombine.low %v397, %v397
        %399 = vrot.lane.b32.xlu0 %v398, 126
        %v400 = vpop.permute.xlu0 %399
        %vm402 = vcmask 1046516
        %403 = vst.msk [vmem:[#allocation2 + $0x18] sm:$0x30] %vm402, %v400
        %v404 = vld [vmem:[%s221] sm:$0xff]
        %v406 = vcombine.low %v404, %v404
        %v408 = vunpack.c.l.s4 1983009808
        %v409 = vunpack.c.0.s8 %v408
        %v410 = vlaneseq
        %v411 = vshrl.u32 %v410, 7
        %v412 = vsub.s32 %v409, %v411
        %v413 = vrot.slane %v406, %v412
        %v415 = vunpack.c.l.s4 1983009808
        %v416 = vunpack.c.0.s8 %v415
        %v417 = vlaneseq
        %v418 = vshrl.u32 %v417, 7
        %v419 = vsub.s32 %v416, %v418
        %v420 = vrot.slane %v404, %v419
        %v421 = vcombine.low %v413, %v413
        %v422 = vcombine.low %v420, %v420
        %423 = vrot.lane.b32.xlu0 %v421, 118
        %v424 = vpop.permute.xlu0 %423
        %425 = vrot.lane.b32.xlu0 %v413, 118
        %v426 = vpop.permute.xlu0 %425
        %427 = vrot.lane.b32.xlu0 %v422, 118
        %v428 = vpop.permute.xlu0 %427
        %429 = vrot.lane.b32.xlu0 %v420, 118
        %v430 = vpop.permute.xlu0 %429
        %vm431 = vcmask 965632
        %v432 = vsel %vm431, %v424, %v426
        %v433 = vsel %vm431, %v426, %v428
        %v434 = vsel %vm431, %v428, %v430
        %439 = vst [vmem:[#allocation2] sm:$0xc0] %v432
        %440 = vst [vmem:[#allocation2 + $0x8] sm:$0xc0] %v433
        %441 = vst [vmem:[#allocation2 + $0x10] sm:$0xc0] %v434
        %vm442 = vcmask 965638
        %443 = vst.msk [vmem:[#allocation2 + $0x18] sm:$0xc0] %vm442, %v430
        %v444 = vld [vmem:[%s230] sm:$0x3]
        %v446 = vcombine.low %v444, %v444
        %v448 = vunpack.c.l.s4 1983009808
        %v449 = vunpack.c.0.s8 %v448
        %v450 = vlaneseq
        %v451 = vshrl.u32 %v450, 7
        %v452 = vsub.s32 %v449, %v451
        %v453 = vrot.slane %v446, %v452
        %v454 = vcombine.low %v453, %v453
        %455 = vrot.lane.b32.xlu0 %v454, 118
        %v456 = vpop.permute.xlu0 %455
        %vm458 = vcmask 1048502
        %459 = vst.msk [vmem:[#allocation2 + $0x18] sm:$0xc0] %vm458, %v456
        %v460 = vld [vmem:[%s221] sm:$0xff]
        %v462 = vcombine.high %v460, %v460
        %v464 = vunpack.c.l.s4 1983009808
        %v465 = vunpack.c.0.s8 %v464
        %v466 = vlaneseq
        %v467 = vshrl.u32 %v466, 7
        %v468 = vsub.s32 %v465, %v467
        %v469 = vrot.slane %v460, %v468
        %v471 = vunpack.c.l.s4 1983009808
        %v472 = vunpack.c.0.s8 %v471
        %v473 = vlaneseq
        %v474 = vshrl.u32 %v473, 7
        %v475 = vsub.s32 %v472, %v474
        %v476 = vrot.slane %v462, %v475
        %v477 = vcombine.high %v469, %v469
        %v478 = vcombine.high %v476, %v476
        %479 = vrot.lane.b32.xlu0 %v469, 117
        %v480 = vpop.permute.xlu0 %479
        %481 = vrot.lane.b32.xlu0 %v477, 117
        %v482 = vpop.permute.xlu0 %481
        %483 = vrot.lane.b32.xlu0 %v476, 117
        %v484 = vpop.permute.xlu0 %483
        %485 = vrot.lane.b32.xlu0 %v478, 117
        %v486 = vpop.permute.xlu0 %485
        %vm487 = vcmask 957440
        %v488 = vsel %vm487, %v480, %v482
        %v489 = vsel %vm487, %v482, %v484
        %v490 = vsel %vm487, %v484, %v486
        %495 = vst [vmem:[#allocation2 + $0x20] sm:$0x3] %v488
        %496 = vst [vmem:[#allocation2 + $0x28] sm:$0x3] %v489
        %497 = vst [vmem:[#allocation2 + $0x30] sm:$0x3] %v490
        %vm498 = vcmask 951296
        %499 = vst.msk [vmem:[#allocation2 + $0x38] sm:$0x3] %vm498, %v486
        %v500 = vld [vmem:[%s230] sm:$0x3]
        %v503 = vunpack.c.l.s4 1983009808
        %v504 = vunpack.c.0.s8 %v503
        %v505 = vlaneseq
        %v506 = vshrl.u32 %v505, 7
        %v507 = vsub.s32 %v504, %v506
        %v508 = vrot.slane %v500, %v507
        %509 = vrot.lane.b32.xlu0 %v508, 117
        %v510 = vpop.permute.xlu0 %509
        %vm512 = vcmask 1042344
        %513 = vst.msk [vmem:[#allocation2 + $0x38] sm:$0x3] %vm512, %v510
        %v514 = vld [vmem:[%s221] sm:$0xff]
        %v516 = vcombine.low %v514, %v514
        %v518 = vunpack.c.l.s4 1983009808
        %v519 = vunpack.c.0.s8 %v518
        %v520 = vlaneseq
        %v521 = vshrl.u32 %v520, 7
        %v522 = vsub.s32 %v519, %v521
        %v523 = vrot.slane %v516, %v522
        %v525 = vunpack.c.l.s4 1983009808
        %v526 = vunpack.c.0.s8 %v525
        %v527 = vlaneseq
        %v528 = vshrl.u32 %v527, 7
        %v529 = vsub.s32 %v526, %v528
        %v530 = vrot.slane %v514, %v529
        %v531 = vcombine.high %v523, %v523
        %v532 = vcombine.high %v530, %v530
        %533 = vrot.lane.b32.xlu0 %v523, 116
        %v534 = vpop.permute.xlu0 %533
        %535 = vrot.lane.b32.xlu0 %v531, 116
        %v536 = vpop.permute.xlu0 %535
        %537 = vrot.lane.b32.xlu0 %v530, 116
        %v538 = vpop.permute.xlu0 %537
        %539 = vrot.lane.b32.xlu0 %v532, 116
        %v540 = vpop.permute.xlu0 %539
        %vm541 = vcmask 949248
        %v542 = vsel %vm541, %v534, %v536
        %v543 = vsel %vm541, %v536, %v538
        %v544 = vsel %vm541, %v538, %v540
        %549 = vst [vmem:[#allocation2 + $0x20] sm:$0xc] %v542
        %550 = vst [vmem:[#allocation2 + $0x28] sm:$0xc] %v543
        %551 = vst [vmem:[#allocation2 + $0x30] sm:$0xc] %v544
        %vm552 = vcmask 945154
        %553 = vst.msk [vmem:[#allocation2 + $0x38] sm:$0xc] %vm552, %v540
        %v554 = vld [vmem:[%s230] sm:$0x3]
        %v556 = vcombine.low %v554, %v554
        %v558 = vunpack.c.l.s4 1983009808
        %v559 = vunpack.c.0.s8 %v558
        %v560 = vlaneseq
        %v561 = vshrl.u32 %v560, 7
        %v562 = vsub.s32 %v559, %v561
        %v563 = vrot.slane %v556, %v562
        %564 = vrot.lane.b32.xlu0 %v563, 116
        %v565 = vpop.permute.xlu0 %564
        %vm567 = vcmask 1044386
        %568 = vst.msk [vmem:[#allocation2 + $0x38] sm:$0xc] %vm567, %v565
        %v569 = vld [vmem:[%s221] sm:$0xff]
        %v571 = vcombine.high %v569, %v569
        %v573 = vunpack.c.l.s4 1983009808
        %v574 = vunpack.c.0.s8 %v573
        %v575 = vlaneseq
        %v576 = vshrl.u32 %v575, 7
        %v577 = vsub.s32 %v574, %v576
        %v578 = vrot.slane %v569, %v577
        %v580 = vunpack.c.l.s4 1983009808
        %v581 = vunpack.c.0.s8 %v580
        %v582 = vlaneseq
        %v583 = vshrl.u32 %v582, 7
        %v584 = vsub.s32 %v581, %v583
        %v585 = vrot.slane %v571, %v584
        %v586 = vcombine.low %v578, %v578
        %v587 = vcombine.low %v585, %v585
        %588 = vrot.lane.b32.xlu0 %v586, 108
        %v589 = vpop.permute.xlu0 %588
        %590 = vrot.lane.b32.xlu0 %v578, 108
        %v591 = vpop.permute.xlu0 %590
        %592 = vrot.lane.b32.xlu0 %v587, 108
        %v593 = vpop.permute.xlu0 %592
        %594 = vrot.lane.b32.xlu0 %v585, 108
        %v595 = vpop.permute.xlu0 %594
        %vm596 = vcmask 883712
        %v597 = vsel %vm596, %v589, %v591
        %v598 = vsel %vm596, %v591, %v593
        %v599 = vsel %vm596, %v593, %v595
        %604 = vst [vmem:[#allocation2 + $0x20] sm:$0x30] %v597
        %605 = vst [vmem:[#allocation2 + $0x28] sm:$0x30] %v598
        %606 = vst [vmem:[#allocation2 + $0x30] sm:$0x30] %v599
        %vm607 = vcmask 881668
        %608 = vst.msk [vmem:[#allocation2 + $0x38] sm:$0x30] %vm607, %v595
        %v609 = vld [vmem:[%s230] sm:$0x3]
        %v612 = vunpack.c.l.s4 1983009808
        %v613 = vunpack.c.0.s8 %v612
        %v614 = vlaneseq
        %v615 = vshrl.u32 %v614, 7
        %v616 = vsub.s32 %v613, %v615
        %v617 = vrot.slane %v609, %v616
        %v618 = vcombine.low %v617, %v617
        %619 = vrot.lane.b32.xlu0 %v618, 108
        %v620 = vpop.permute.xlu0 %619
        %vm622 = vcmask 1046372
        %623 = vst.msk [vmem:[#allocation2 + $0x38] sm:$0x30] %vm622, %v620
        %v624 = vld [vmem:[%s221] sm:$0xff]
        %v626 = vcombine.low %v624, %v624
        %v628 = vunpack.c.l.s4 1983009808
        %v629 = vunpack.c.0.s8 %v628
        %v630 = vlaneseq
        %v631 = vshrl.u32 %v630, 7
        %v632 = vsub.s32 %v629, %v631
        %v633 = vrot.slane %v626, %v632
        %v635 = vunpack.c.l.s4 1983009808
        %v636 = vunpack.c.0.s8 %v635
        %v637 = vlaneseq
        %v638 = vshrl.u32 %v637, 7
        %v639 = vsub.s32 %v636, %v638
        %v640 = vrot.slane %v624, %v639
        %v641 = vcombine.low %v633, %v633
        %v642 = vcombine.low %v640, %v640
        %643 = vrot.lane.b32.xlu0 %v641, 107
        %v644 = vpop.permute.xlu0 %643
        %645 = vrot.lane.b32.xlu0 %v633, 107
        %v646 = vpop.permute.xlu0 %645
        %647 = vrot.lane.b32.xlu0 %v642, 107
        %v648 = vpop.permute.xlu0 %647
        %649 = vrot.lane.b32.xlu0 %v640, 107
        %v650 = vpop.permute.xlu0 %649
        %vm651 = vcmask 875520
        %v652 = vsel %vm651, %v644, %v646
        %v653 = vsel %vm651, %v646, %v648
        %v654 = vsel %vm651, %v648, %v650
        %659 = vst [vmem:[#allocation2 + $0x20] sm:$0xc0] %v652
        %660 = vst [vmem:[#allocation2 + $0x28] sm:$0xc0] %v653
        %661 = vst [vmem:[#allocation2 + $0x30] sm:$0xc0] %v654
        %vm662 = vcmask 875526
        %663 = vst.msk [vmem:[#allocation2 + $0x38] sm:$0xc0] %vm662, %v650
        %v664 = vld [vmem:[%s230] sm:$0x3]
        %v666 = vcombine.low %v664, %v664
        %v668 = vunpack.c.l.s4 1983009808
        %v669 = vunpack.c.0.s8 %v668
        %v670 = vlaneseq
        %v671 = vshrl.u32 %v670, 7
        %v672 = vsub.s32 %v669, %v671
        %v673 = vrot.slane %v666, %v672
        %v674 = vcombine.low %v673, %v673
        %675 = vrot.lane.b32.xlu0 %v674, 107
        %v676 = vpop.permute.xlu0 %675
        %vm678 = vcmask 1048414
        %679 = vst.msk [vmem:[#allocation2 + $0x38] sm:$0xc0] %vm678, %v676
        %v680 = vld [vmem:[%s221] sm:$0xff]
        %v682 = vcombine.high %v680, %v680
        %v684 = vunpack.c.l.s4 1983009808
        %v685 = vunpack.c.0.s8 %v684
        %v686 = vlaneseq
        %v687 = vshrl.u32 %v686, 7
        %v688 = vsub.s32 %v685, %v687
        %v689 = vrot.slane %v680, %v688
        %v691 = vunpack.c.l.s4 1983009808
        %v692 = vunpack.c.0.s8 %v691
        %v693 = vlaneseq
        %v694 = vshrl.u32 %v693, 7
        %v695 = vsub.s32 %v692, %v694
        %v696 = vrot.slane %v682, %v695
        %v697 = vcombine.high %v689, %v689
        %v698 = vcombine.high %v696, %v696
        %699 = vrot.lane.b32.xlu0 %v689, 106
        %v700 = vpop.permute.xlu0 %699
        %701 = vrot.lane.b32.xlu0 %v697, 106
        %v702 = vpop.permute.xlu0 %701
        %703 = vrot.lane.b32.xlu0 %v696, 106
        %v704 = vpop.permute.xlu0 %703
        %705 = vrot.lane.b32.xlu0 %v698, 106
        %v706 = vpop.permute.xlu0 %705
        %vm707 = vcmask 867328
        %v708 = vsel %vm707, %v700, %v702
        %v709 = vsel %vm707, %v702, %v704
        %v710 = vsel %vm707, %v704, %v706
        %715 = vst [vmem:[#allocation2 + $0x40] sm:$0x3] %v708
        %716 = vst [vmem:[#allocation2 + $0x48] sm:$0x3] %v709
        %717 = vst [vmem:[#allocation2 + $0x50] sm:$0x3] %v710
        %vm718 = vcmask 861184
        %719 = vst.msk [vmem:[#allocation2 + $0x58] sm:$0x3] %vm718, %v706
        %v720 = vld [vmem:[%s230] sm:$0x3]
        %v723 = vunpack.c.l.s4 1983009808
        %v724 = vunpack.c.0.s8 %v723
        %v725 = vlaneseq
        %v726 = vshrl.u32 %v725, 7
        %v727 = vsub.s32 %v724, %v726
        %v728 = vrot.slane %v720, %v727
        %729 = vrot.lane.b32.xlu0 %v728, 106
        %v730 = vpop.permute.xlu0 %729
        %vm732 = vcmask 1042256
        %733 = vst.msk [vmem:[#allocation2 + $0x58] sm:$0x3] %vm732, %v730
        %v734 = vld [vmem:[%s221] sm:$0xff]
        %v736 = vcombine.low %v734, %v734
        %v738 = vunpack.c.l.s4 1983009808
        %v739 = vunpack.c.0.s8 %v738
        %v740 = vlaneseq
        %v741 = vshrl.u32 %v740, 7
        %v742 = vsub.s32 %v739, %v741
        %v743 = vrot.slane %v736, %v742
        %v745 = vunpack.c.l.s4 1983009808
        %v746 = vunpack.c.0.s8 %v745
        %v747 = vlaneseq
        %v748 = vshrl.u32 %v747, 7
        %v749 = vsub.s32 %v746, %v748
        %v750 = vrot.slane %v734, %v749
        %v751 = vcombine.high %v743, %v743
        %v752 = vcombine.high %v750, %v750
        %753 = vrot.lane.b32.xlu0 %v743, 28
        %v754 = vpop.permute.xlu0 %753
        %755 = vrot.lane.b32.xlu0 %v751, 28
        %v756 = vpop.permute.xlu0 %755
        %757 = vrot.lane.b32.xlu0 %v750, 28
        %v758 = vpop.permute.xlu0 %757
        %759 = vrot.lane.b32.xlu0 %v752, 28
        %v760 = vpop.permute.xlu0 %759
        %vm761 = vcmask 228352
        %v762 = vsel %vm761, %v754, %v756
        %v763 = vsel %vm761, %v756, %v758
        %v764 = vsel %vm761, %v758, %v760
        %769 = vst [vmem:[#allocation2 + $0x40] sm:$0xc] %v762
        %770 = vst [vmem:[#allocation2 + $0x48] sm:$0xc] %v763
        %771 = vst [vmem:[#allocation2 + $0x50] sm:$0xc] %v764
        %vm772 = vcmask 224258
        %773 = vst.msk [vmem:[#allocation2 + $0x58] sm:$0xc] %vm772, %v760
        %v774 = vld [vmem:[%s230] sm:$0x3]
        %v776 = vcombine.low %v774, %v774
        %v778 = vunpack.c.l.s4 1983009808
        %v779 = vunpack.c.0.s8 %v778
        %v780 = vlaneseq
        %v781 = vshrl.u32 %v780, 7
        %v782 = vsub.s32 %v779, %v781
        %v783 = vrot.slane %v776, %v782
        %784 = vrot.lane.b32.xlu0 %v783, 28
        %v785 = vpop.permute.xlu0 %784
        %vm787 = vcmask 1043682
        %788 = vst.msk [vmem:[#allocation2 + $0x58] sm:$0xc] %vm787, %v785
        %v789 = vld [vmem:[%s221] sm:$0xff]
        %v791 = vcombine.high %v789, %v789
        %v793 = vunpack.c.l.s4 1983009808
        %v794 = vunpack.c.0.s8 %v793
        %v795 = vlaneseq
        %v796 = vshrl.u32 %v795, 7
        %v797 = vsub.s32 %v794, %v796
        %v798 = vrot.slane %v789, %v797
        %v800 = vunpack.c.l.s4 1983009808
        %v801 = vunpack.c.0.s8 %v800
        %v802 = vlaneseq
        %v803 = vshrl.u32 %v802, 7
        %v804 = vsub.s32 %v801, %v803
        %v805 = vrot.slane %v791, %v804
        %v806 = vcombine.low %v798, %v798
        %v807 = vcombine.low %v805, %v805
        %808 = vrot.lane.b32.xlu0 %v806, 27
        %v809 = vpop.permute.xlu0 %808
        %810 = vrot.lane.b32.xlu0 %v798, 27
        %v811 = vpop.permute.xlu0 %810
        %812 = vrot.lane.b32.xlu0 %v807, 27
        %v813 = vpop.permute.xlu0 %812
        %814 = vrot.lane.b32.xlu0 %v805, 27
        %v815 = vpop.permute.xlu0 %814
        %vm816 = vcmask 220160
        %v817 = vsel %vm816, %v809, %v811
        %v818 = vsel %vm816, %v811, %v813
        %v819 = vsel %vm816, %v813, %v815
        %824 = vst [vmem:[#allocation2 + $0x40] sm:$0x30] %v817
        %825 = vst [vmem:[#allocation2 + $0x48] sm:$0x30] %v818
        %826 = vst [vmem:[#allocation2 + $0x50] sm:$0x30] %v819
        %vm827 = vcmask 218116
        %828 = vst.msk [vmem:[#allocation2 + $0x58] sm:$0x30] %vm827, %v815
        %v829 = vld [vmem:[%s230] sm:$0x3]
        %v832 = vunpack.c.l.s4 1983009808
        %v833 = vunpack.c.0.s8 %v832
        %v834 = vlaneseq
        %v835 = vshrl.u32 %v834, 7
        %v836 = vsub.s32 %v833, %v835
        %v837 = vrot.slane %v829, %v836
        %v838 = vcombine.low %v837, %v837
        %839 = vrot.lane.b32.xlu0 %v838, 27
        %v840 = vpop.permute.xlu0 %839
        %vm842 = vcmask 1045724
        %843 = vst.msk [vmem:[#allocation2 + $0x58] sm:$0x30] %vm842, %v840
        %v844 = vld [vmem:[%s221] sm:$0xff]
        %v846 = vcombine.low %v844, %v844
        %v848 = vunpack.c.l.s4 1983009808
        %v849 = vunpack.c.0.s8 %v848
        %v850 = vlaneseq
        %v851 = vshrl.u32 %v850, 7
        %v852 = vsub.s32 %v849, %v851
        %v853 = vrot.slane %v846, %v852
        %v855 = vunpack.c.l.s4 1983009808
        %v856 = vunpack.c.0.s8 %v855
        %v857 = vlaneseq
        %v858 = vshrl.u32 %v857, 7
        %v859 = vsub.s32 %v856, %v858
        %v860 = vrot.slane %v844, %v859
        %v861 = vcombine.low %v853, %v853
        %v862 = vcombine.low %v860, %v860
        %863 = vrot.lane.b32.xlu0 %v861, 26
        %v864 = vpop.permute.xlu0 %863
        %865 = vrot.lane.b32.xlu0 %v853, 26
        %v866 = vpop.permute.xlu0 %865
        %867 = vrot.lane.b32.xlu0 %v862, 26
        %v868 = vpop.permute.xlu0 %867
        %869 = vrot.lane.b32.xlu0 %v860, 26
        %v870 = vpop.permute.xlu0 %869
        %vm871 = vcmask 211968
        %v872 = vsel %vm871, %v864, %v866
        %v873 = vsel %vm871, %v866, %v868
        %v874 = vsel %vm871, %v868, %v870
        %879 = vst [vmem:[#allocation2 + $0x40] sm:$0xc0] %v872
        %880 = vst [vmem:[#allocation2 + $0x48] sm:$0xc0] %v873
        %881 = vst [vmem:[#allocation2 + $0x50] sm:$0xc0] %v874
        %vm882 = vcmask 211974
        %883 = vst.msk [vmem:[#allocation2 + $0x58] sm:$0xc0] %vm882, %v870
        %v884 = vld [vmem:[%s230] sm:$0x3]
        %v886 = vcombine.low %v884, %v884
        %v888 = vunpack.c.l.s4 1983009808
        %v889 = vunpack.c.0.s8 %v888
        %v890 = vlaneseq
        %v891 = vshrl.u32 %v890, 7
        %v892 = vsub.s32 %v889, %v891
        %v893 = vrot.slane %v886, %v892
        %v894 = vcombine.low %v893, %v893
        %895 = vrot.lane.b32.xlu0 %v894, 26
        %v896 = vpop.permute.xlu0 %895
        %vm898 = vcmask 1047766
        %899 = vst.msk [vmem:[#allocation2 + $0x58] sm:$0xc0] %vm898, %v896
        %v900 = vld [vmem:[%s221] sm:$0xff]
        %v902 = vcombine.high %v900, %v900
        %v904 = vunpack.c.l.s4 1983009808
        %v905 = vunpack.c.0.s8 %v904
        %v906 = vlaneseq
        %v907 = vshrl.u32 %v906, 7
        %v908 = vsub.s32 %v905, %v907
        %v909 = vrot.slane %v900, %v908
        %v911 = vunpack.c.l.s4 1983009808
        %v912 = vunpack.c.0.s8 %v911
        %v913 = vlaneseq
        %v914 = vshrl.u32 %v913, 7
        %v915 = vsub.s32 %v912, %v914
        %v916 = vrot.slane %v902, %v915
        %v917 = vcombine.high %v909, %v909
        %v918 = vcombine.high %v916, %v916
        %919 = vrot.lane.b32.xlu0 %v909, 18
        %v920 = vpop.permute.xlu0 %919
        %921 = vrot.lane.b32.xlu0 %v917, 18
        %v922 = vpop.permute.xlu0 %921
        %923 = vrot.lane.b32.xlu0 %v916, 18
        %v924 = vpop.permute.xlu0 %923
        %925 = vrot.lane.b32.xlu0 %v918, 18
        %v926 = vpop.permute.xlu0 %925
        %vm927 = vcmask 146432
        %v928 = vsel %vm927, %v920, %v922
        %v929 = vsel %vm927, %v922, %v924
        %v930 = vsel %vm927, %v924, %v926
        %935 = vst [vmem:[#allocation2 + $0x60] sm:$0x3] %v928
        %936 = vst [vmem:[#allocation2 + $0x68] sm:$0x3] %v929
        %937 = vst [vmem:[#allocation2 + $0x70] sm:$0x3] %v930
        %vm938 = vcmask 140288
        %939 = vst.msk [vmem:[#allocation2 + $0x78] sm:$0x3] %vm938, %v926
        %v940 = vld [vmem:[%s230] sm:$0x3]
        %v943 = vunpack.c.l.s4 1983009808
        %v944 = vunpack.c.0.s8 %v943
        %v945 = vlaneseq
        %v946 = vshrl.u32 %v945, 7
        %v947 = vsub.s32 %v944, %v946
        %v948 = vrot.slane %v940, %v947
        %949 = vrot.lane.b32.xlu0 %v948, 18
        %v950 = vpop.permute.xlu0 %949
        %vm952 = vcmask 1041552
        %953 = vst.msk [vmem:[#allocation2 + $0x78] sm:$0x3] %vm952, %v950
        %v954 = vld [vmem:[%s221] sm:$0xff]
        %v956 = vcombine.low %v954, %v954
        %v958 = vunpack.c.l.s4 1983009808
        %v959 = vunpack.c.0.s8 %v958
        %v960 = vlaneseq
        %v961 = vshrl.u32 %v960, 7
        %v962 = vsub.s32 %v959, %v961
        %v963 = vrot.slane %v956, %v962
        %v965 = vunpack.c.l.s4 1983009808
        %v966 = vunpack.c.0.s8 %v965
        %v967 = vlaneseq
        %v968 = vshrl.u32 %v967, 7
        %v969 = vsub.s32 %v966, %v968
        %v970 = vrot.slane %v954, %v969
        %v971 = vcombine.high %v963, %v963
        %v972 = vcombine.high %v970, %v970
        %973 = vrot.lane.b32.xlu0 %v963, 17
        %v974 = vpop.permute.xlu0 %973
        %975 = vrot.lane.b32.xlu0 %v971, 17
        %v976 = vpop.permute.xlu0 %975
        %977 = vrot.lane.b32.xlu0 %v970, 17
        %v978 = vpop.permute.xlu0 %977
        %979 = vrot.lane.b32.xlu0 %v972, 17
        %v980 = vpop.permute.xlu0 %979
        %vm981 = vcmask 138240
        %v982 = vsel %vm981, %v974, %v976
        %v983 = vsel %vm981, %v976, %v978
        %v984 = vsel %vm981, %v978, %v980
        %989 = vst [vmem:[#allocation2 + $0x60] sm:$0xc] %v982
        %990 = vst [vmem:[#allocation2 + $0x68] sm:$0xc] %v983
        %991 = vst [vmem:[#allocation2 + $0x70] sm:$0xc] %v984
        %vm992 = vcmask 134146
        %993 = vst.msk [vmem:[#allocation2 + $0x78] sm:$0xc] %vm992, %v980
        %v994 = vld [vmem:[%s230] sm:$0x3]
        %v996 = vcombine.low %v994, %v994
        %v998 = vunpack.c.l.s4 1983009808
        %v999 = vunpack.c.0.s8 %v998
        %v1000 = vlaneseq
        %v1001 = vshrl.u32 %v1000, 7
        %v1002 = vsub.s32 %v999, %v1001
        %v1003 = vrot.slane %v996, %v1002
        %1004 = vrot.lane.b32.xlu0 %v1003, 17
        %v1005 = vpop.permute.xlu0 %1004
        %vm1007 = vcmask 1043594
        %1008 = vst.msk [vmem:[#allocation2 + $0x78] sm:$0xc] %vm1007, %v1005
        %v1009 = vld [vmem:[%s221] sm:$0xff]
        %v1011 = vcombine.high %v1009, %v1009
        %v1013 = vunpack.c.l.s4 1983009808
        %v1014 = vunpack.c.0.s8 %v1013
        %v1015 = vlaneseq
        %v1016 = vshrl.u32 %v1015, 7
        %v1017 = vsub.s32 %v1014, %v1016
        %v1018 = vrot.slane %v1009, %v1017
        %v1020 = vunpack.c.l.s4 1983009808
        %v1021 = vunpack.c.0.s8 %v1020
        %v1022 = vlaneseq
        %v1023 = vshrl.u32 %v1022, 7
        %v1024 = vsub.s32 %v1021, %v1023
        %v1025 = vrot.slane %v1011, %v1024
        %v1026 = vcombine.low %v1018, %v1018
        %v1027 = vcombine.low %v1025, %v1025
        %1028 = vrot.lane.b32.xlu0 %v1026, 16
        %v1029 = vpop.permute.xlu0 %1028
        %1030 = vrot.lane.b32.xlu0 %v1018, 16
        %v1031 = vpop.permute.xlu0 %1030
        %1032 = vrot.lane.b32.xlu0 %v1027, 16
        %v1033 = vpop.permute.xlu0 %1032
        %1034 = vrot.lane.b32.xlu0 %v1025, 16
        %v1035 = vpop.permute.xlu0 %1034
        %vm1036 = vcmask 130048
        %v1037 = vsel %vm1036, %v1029, %v1031
        %v1038 = vsel %vm1036, %v1031, %v1033
        %v1039 = vsel %vm1036, %v1033, %v1035
        %1044 = vst [vmem:[#allocation2 + $0x60] sm:$0x30] %v1037
        %1045 = vst [vmem:[#allocation2 + $0x68] sm:$0x30] %v1038
        %1046 = vst [vmem:[#allocation2 + $0x70] sm:$0x30] %v1039
        %vm1047 = vcmask 128004
        %1048 = vst.msk [vmem:[#allocation2 + $0x78] sm:$0x30] %vm1047, %v1035
        %v1049 = vld [vmem:[%s230] sm:$0x3]
        %v1052 = vunpack.c.l.s4 1983009808
        %v1053 = vunpack.c.0.s8 %v1052
        %v1054 = vlaneseq
        %v1055 = vshrl.u32 %v1054, 7
        %v1056 = vsub.s32 %v1053, %v1055
        %v1057 = vrot.slane %v1049, %v1056
        %v1058 = vcombine.low %v1057, %v1057
        %1059 = vrot.lane.b32.xlu0 %v1058, 16
        %v1060 = vpop.permute.xlu0 %1059
        %vm1062 = vcmask 1045636
        %1063 = vst.msk [vmem:[#allocation2 + $0x78] sm:$0x30] %vm1062, %v1060
        %v1064 = vld [vmem:[%s221] sm:$0xff]
        %v1066 = vcombine.low %v1064, %v1064
        %v1068 = vunpack.c.l.s4 1983009808
        %v1069 = vunpack.c.0.s8 %v1068
        %v1070 = vlaneseq
        %v1071 = vshrl.u32 %v1070, 7
        %v1072 = vsub.s32 %v1069, %v1071
        %v1073 = vrot.slane %v1066, %v1072
        %v1075 = vunpack.c.l.s4 1983009808
        %v1076 = vunpack.c.0.s8 %v1075
        %v1077 = vlaneseq
        %v1078 = vshrl.u32 %v1077, 7
        %v1079 = vsub.s32 %v1076, %v1078
        %v1080 = vrot.slane %v1064, %v1079
        %v1081 = vcombine.low %v1073, %v1073
        %v1082 = vcombine.low %v1080, %v1080
        %1083 = vrot.lane.b32.xlu0 %v1081, 8
        %v1084 = vpop.permute.xlu0 %1083
        %1085 = vrot.lane.b32.xlu0 %v1073, 8
        %v1086 = vpop.permute.xlu0 %1085
        %1087 = vrot.lane.b32.xlu0 %v1082, 8
        %v1088 = vpop.permute.xlu0 %1087
        %1089 = vrot.lane.b32.xlu0 %v1080, 8
        %v1090 = vpop.permute.xlu0 %1089
        %vm1091 = vcmask 64512
        %v1092 = vsel %vm1091, %v1084, %v1086
        %v1093 = vsel %vm1091, %v1086, %v1088
        %v1094 = vsel %vm1091, %v1088, %v1090
        %1099 = vst [vmem:[#allocation2 + $0x60] sm:$0xc0] %v1092
        %1100 = vst [vmem:[#allocation2 + $0x68] sm:$0xc0] %v1093
        %1101 = vst [vmem:[#allocation2 + $0x70] sm:$0xc0] %v1094
        %vm1102 = vcmask 64518
        %1103 = vst.msk [vmem:[#allocation2 + $0x78] sm:$0xc0] %vm1102, %v1090
        %v1104 = vld [vmem:[%s230] sm:$0x3]
        %v1106 = vcombine.low %v1104, %v1104
        %v1108 = vunpack.c.l.s4 1983009808
        %v1109 = vunpack.c.0.s8 %v1108
        %v1110 = vlaneseq
        %v1111 = vshrl.u32 %v1110, 7
        %v1112 = vsub.s32 %v1109, %v1111
        %v1113 = vrot.slane %v1106, %v1112
        %v1114 = vcombine.low %v1113, %v1113
        %1115 = vrot.lane.b32.xlu0 %v1114, 8
        %v1116 = vpop.permute.xlu0 %1115
        %vm1118 = vcmask 1047622
        %1119 = vst.msk [vmem:[#allocation2 + $0x78] sm:$0xc0] %vm1118, %v1116
        %v1120 = vld [vmem:[%s221] sm:$0xff]
        %v1122 = vcombine.high %v1120, %v1120
        %v1124 = vunpack.c.l.s4 1983009808
        %v1125 = vunpack.c.0.s8 %v1124
        %v1126 = vlaneseq
        %v1127 = vshrl.u32 %v1126, 7
        %v1128 = vsub.s32 %v1125, %v1127
        %v1129 = vrot.slane %v1120, %v1128
        %v1131 = vunpack.c.l.s4 1983009808
        %v1132 = vunpack.c.0.s8 %v1131
        %v1133 = vlaneseq
        %v1134 = vshrl.u32 %v1133, 7
        %v1135 = vsub.s32 %v1132, %v1134
        %v1136 = vrot.slane %v1122, %v1135
        %v1137 = vcombine.high %v1129, %v1129
        %v1138 = vcombine.high %v1136, %v1136
        %1139 = vrot.lane.b32.xlu0 %v1129, 7
        %v1140 = vpop.permute.xlu0 %1139
        %1141 = vrot.lane.b32.xlu0 %v1137, 7
        %v1142 = vpop.permute.xlu0 %1141
        %1143 = vrot.lane.b32.xlu0 %v1136, 7
        %v1144 = vpop.permute.xlu0 %1143
        %1145 = vrot.lane.b32.xlu0 %v1138, 7
        %v1146 = vpop.permute.xlu0 %1145
        %vm1147 = vcmask 56320
        %v1148 = vsel %vm1147, %v1140, %v1142
        %v1149 = vsel %vm1147, %v1142, %v1144
        %v1150 = vsel %vm1147, %v1144, %v1146
        %1155 = vst [vmem:[#allocation2 + $0x80] sm:$0x3] %v1148
        %1156 = vst [vmem:[#allocation2 + $0x88] sm:$0x3] %v1149
        %1157 = vst [vmem:[#allocation2 + $0x90] sm:$0x3] %v1150
        %vm1158 = vcmask 50176
        %1159 = vst.msk [vmem:[#allocation2 + $0x98] sm:$0x3] %vm1158, %v1146
        %v1160 = vld [vmem:[%s230] sm:$0x3]
        %v1163 = vunpack.c.l.s4 1983009808
        %v1164 = vunpack.c.0.s8 %v1163
        %v1165 = vlaneseq
        %v1166 = vshrl.u32 %v1165, 7
        %v1167 = vsub.s32 %v1164, %v1166
        %v1168 = vrot.slane %v1160, %v1167
        %1169 = vrot.lane.b32.xlu0 %v1168, 7
        %v1170 = vpop.permute.xlu0 %1169
        %vm1172 = vcmask 1041464
        %1173 = vst.msk [vmem:[#allocation2 + $0x98] sm:$0x3] %vm1172, %v1170
        %v1174 = vld [vmem:[%s221] sm:$0xff]
        %v1176 = vcombine.low %v1174, %v1174
        %v1178 = vunpack.c.l.s4 1983009808
        %v1179 = vunpack.c.0.s8 %v1178
        %v1180 = vlaneseq
        %v1181 = vshrl.u32 %v1180, 7
        %v1182 = vsub.s32 %v1179, %v1181
        %v1183 = vrot.slane %v1176, %v1182
        %v1185 = vunpack.c.l.s4 1983009808
        %v1186 = vunpack.c.0.s8 %v1185
        %v1187 = vlaneseq
        %v1188 = vshrl.u32 %v1187, 7
        %v1189 = vsub.s32 %v1186, %v1188
        %v1190 = vrot.slane %v1174, %v1189
        %v1191 = vcombine.high %v1183, %v1183
        %v1192 = vcombine.high %v1190, %v1190
        %1193 = vrot.lane.b32.xlu0 %v1183, 6
        %v1194 = vpop.permute.xlu0 %1193
        %1195 = vrot.lane.b32.xlu0 %v1191, 6
        %v1196 = vpop.permute.xlu0 %1195
        %1197 = vrot.lane.b32.xlu0 %v1190, 6
        %v1198 = vpop.permute.xlu0 %1197
        %1199 = vrot.lane.b32.xlu0 %v1192, 6
        %v1200 = vpop.permute.xlu0 %1199
        %vm1201 = vcmask 48128
        %v1202 = vsel %vm1201, %v1194, %v1196
        %v1203 = vsel %vm1201, %v1196, %v1198
        %v1204 = vsel %vm1201, %v1198, %v1200
        %1209 = vst [vmem:[#allocation2 + $0x80] sm:$0xc] %v1202
        %1210 = vst [vmem:[#allocation2 + $0x88] sm:$0xc] %v1203
        %1211 = vst [vmem:[#allocation2 + $0x90] sm:$0xc] %v1204
        %vm1212 = vcmask 44034
        %1213 = vst.msk [vmem:[#allocation2 + $0x98] sm:$0xc] %vm1212, %v1200
        %v1214 = vld [vmem:[%s230] sm:$0x3]
        %v1216 = vcombine.low %v1214, %v1214
        %v1218 = vunpack.c.l.s4 1983009808
        %v1219 = vunpack.c.0.s8 %v1218
        %v1220 = vlaneseq
        %v1221 = vshrl.u32 %v1220, 7
        %v1222 = vsub.s32 %v1219, %v1221
        %v1223 = vrot.slane %v1216, %v1222
        %1224 = vrot.lane.b32.xlu0 %v1223, 6
        %v1225 = vpop.permute.xlu0 %1224
        %vm1227 = vcmask 1043506
        %1228 = vst.msk [vmem:[#allocation2 + $0x98] sm:$0xc] %vm1227, %v1225
        %v1229 = vld [vmem:[%s221 + $0x2] sm:$0x3f]
        %v1231 = vcombine.high %v1229, %v1229
        %v1233 = vunpack.c.l.s4 1983009808
        %v1234 = vunpack.c.0.s8 %v1233
        %v1235 = vlaneseq
        %v1236 = vshrl.u32 %v1235, 7
        %v1237 = vsub.s32 %v1234, %v1236
        %v1238 = vrot.slane %v1229, %v1237
        %v1240 = vunpack.c.l.s4 1983009808
        %v1241 = vunpack.c.0.s8 %v1240
        %v1242 = vlaneseq
        %v1243 = vshrl.u32 %v1242, 7
        %v1244 = vsub.s32 %v1241, %v1243
        %v1245 = vrot.slane %v1231, %v1244
        %v1246 = vcombine.low %v1238, %v1238
        %v1247 = vcombine.low %v1245, %v1245
        %1248 = vrot.lane.b32.xlu0 %v1246, 56
        %v1249 = vpop.permute.xlu0 %1248
        %1250 = vrot.lane.b32.xlu0 %v1238, 56
        %v1251 = vpop.permute.xlu0 %1250
        %1252 = vrot.lane.b32.xlu0 %v1247, 56
        %v1253 = vpop.permute.xlu0 %1252
        %vm1254 = vcmask 457728
        %v1255 = vsel %vm1254, %v1249, %v1251
        %v1256 = vsel %vm1254, %v1251, %v1253
        %1260 = vst [vmem:[#allocation2 + $0x80] sm:$0x30] %v1255
        %1261 = vst [vmem:[#allocation2 + $0x88] sm:$0x30] %v1256
        %vm1262 = vcmask 455684
        %1263 = vst.msk [vmem:[#allocation2 + $0x90] sm:$0x30] %vm1262, %v1253
        %v1264 = vld [vmem:[%s230] sm:$0xf]
        %v1267 = vunpack.c.l.s4 1983009808
        %v1268 = vunpack.c.0.s8 %v1267
        %v1269 = vlaneseq
        %v1270 = vshrl.u32 %v1269, 7
        %v1271 = vsub.s32 %v1268, %v1270
        %v1272 = vrot.slane %v1264, %v1271
        %v1273 = vcombine.low %v1272, %v1272
        %1274 = vrot.lane.b32.xlu0 %v1273, 56
        %v1275 = vpop.permute.xlu0 %1274
        %1276 = vrot.lane.b32.xlu0 %v1272, 56
        %v1277 = vpop.permute.xlu0 %1276
        %v1278 = vsel %vm1254, %v1275, %v1277
        %vm1281 = vcmask 1045956
        %1282 = vst.msk [vmem:[#allocation2 + $0x90] sm:$0x30] %vm1281, %v1275
        %1283 = vst [vmem:[#allocation2 + $0x98] sm:$0x30] %v1278
        %v1284 = vld [vmem:[%s221 + $0x2] sm:$0x3f]
        %v1286 = vcombine.low %v1284, %v1284
        %v1288 = vunpack.c.l.s4 1983009808
        %v1289 = vunpack.c.0.s8 %v1288
        %v1290 = vlaneseq
        %v1291 = vshrl.u32 %v1290, 7
        %v1292 = vsub.s32 %v1289, %v1291
        %v1293 = vrot.slane %v1286, %v1292
        %v1295 = vunpack.c.l.s4 1983009808
        %v1296 = vunpack.c.0.s8 %v1295
        %v1297 = vlaneseq
        %v1298 = vshrl.u32 %v1297, 7
        %v1299 = vsub.s32 %v1296, %v1298
        %v1300 = vrot.slane %v1284, %v1299
        %v1301 = vcombine.low %v1293, %v1293
        %v1302 = vcombine.low %v1300, %v1300
        %1303 = vrot.lane.b32.xlu0 %v1301, 55
        %v1304 = vpop.permute.xlu0 %1303
        %1305 = vrot.lane.b32.xlu0 %v1293, 55
        %v1306 = vpop.permute.xlu0 %1305
        %1307 = vrot.lane.b32.xlu0 %v1302, 55
        %v1308 = vpop.permute.xlu0 %1307
        %vm1309 = vcmask 449536
        %v1310 = vsel %vm1309, %v1304, %v1306
        %v1311 = vsel %vm1309, %v1306, %v1308
        %1315 = vst [vmem:[#allocation2 + $0x80] sm:$0xc0] %v1310
        %1316 = vst [vmem:[#allocation2 + $0x88] sm:$0xc0] %v1311
        %vm1317 = vcmask 449542
        %1318 = vst.msk [vmem:[#allocation2 + $0x90] sm:$0xc0] %vm1317, %v1308
        %v1319 = vld [vmem:[%s230] sm:$0xf]
        %v1321 = vcombine.low %v1319, %v1319
        %v1323 = vunpack.c.l.s4 1983009808
        %v1324 = vunpack.c.0.s8 %v1323
        %v1325 = vlaneseq
        %v1326 = vshrl.u32 %v1325, 7
        %v1327 = vsub.s32 %v1324, %v1326
        %v1328 = vrot.slane %v1321, %v1327
        %v1329 = vcombine.low %v1328, %v1328
        %1330 = vrot.lane.b32.xlu0 %v1329, 55
        %v1331 = vpop.permute.xlu0 %1330
        %1332 = vrot.lane.b32.xlu0 %v1328, 55
        %v1333 = vpop.permute.xlu0 %1332
        %v1334 = vsel %vm1309, %v1331, %v1333
        %vm1337 = vcmask 1047998
        %1338 = vst.msk [vmem:[#allocation2 + $0x90] sm:$0xc0] %vm1337, %v1331
        %1339 = vst [vmem:[#allocation2 + $0x98] sm:$0xc0] %v1334
        %v1340 = vld [vmem:[%s221 + $0x2] sm:$0x3f]
        %v1342 = vcombine.high %v1340, %v1340
        %v1344 = vunpack.c.l.s4 1983009808
        %v1345 = vunpack.c.0.s8 %v1344
        %v1346 = vlaneseq
        %v1347 = vshrl.u32 %v1346, 7
        %v1348 = vsub.s32 %v1345, %v1347
        %v1349 = vrot.slane %v1340, %v1348
        %v1351 = vunpack.c.l.s4 1983009808
        %v1352 = vunpack.c.0.s8 %v1351
        %v1353 = vlaneseq
        %v1354 = vshrl.u32 %v1353, 7
        %v1355 = vsub.s32 %v1352, %v1354
        %v1356 = vrot.slane %v1342, %v1355
        %v1357 = vcombine.high %v1349, %v1349
        %1358 = vrot.lane.b32.xlu0 %v1349, 54
        %v1359 = vpop.permute.xlu0 %1358
        %1360 = vrot.lane.b32.xlu0 %v1357, 54
        %v1361 = vpop.permute.xlu0 %1360
        %1362 = vrot.lane.b32.xlu0 %v1356, 54
        %v1363 = vpop.permute.xlu0 %1362
        %vm1364 = vcmask 441344
        %v1365 = vsel %vm1364, %v1359, %v1361
        %v1366 = vsel %vm1364, %v1361, %v1363
        %1370 = vst [vmem:[#allocation2 + $0xa0] sm:$0x3] %v1365
        %1371 = vst [vmem:[#allocation2 + $0xa8] sm:$0x3] %v1366
        %vm1372 = vcmask 435200
        %1373 = vst.msk [vmem:[#allocation2 + $0xb0] sm:$0x3] %vm1372, %v1363
        %v1374 = vld [vmem:[%s230] sm:$0xf]
        %v1377 = vunpack.c.l.s4 1983009808
        %v1378 = vunpack.c.0.s8 %v1377
        %v1379 = vlaneseq
        %v1380 = vshrl.u32 %v1379, 7
        %v1381 = vsub.s32 %v1378, %v1380
        %v1382 = vrot.slane %v1374, %v1381
        %v1383 = vcombine.high %v1382, %v1382
        %1384 = vrot.lane.b32.xlu0 %v1382, 54
        %v1385 = vpop.permute.xlu0 %1384
        %1386 = vrot.lane.b32.xlu0 %v1383, 54
        %v1387 = vpop.permute.xlu0 %1386
        %v1388 = vsel %vm1364, %v1385, %v1387
        %vm1391 = vcmask 1041840
        %1392 = vst.msk [vmem:[#allocation2 + $0xb0] sm:$0x3] %vm1391, %v1385
        %1393 = vst [vmem:[#allocation2 + $0xb8] sm:$0x3] %v1388
        %v1394 = vld [vmem:[%s221 + $0x2] sm:$0x3f]
        %v1396 = vcombine.low %v1394, %v1394
        %v1398 = vunpack.c.l.s4 1983009808
        %v1399 = vunpack.c.0.s8 %v1398
        %v1400 = vlaneseq
        %v1401 = vshrl.u32 %v1400, 7
        %v1402 = vsub.s32 %v1399, %v1401
        %v1403 = vrot.slane %v1396, %v1402
        %v1405 = vunpack.c.l.s4 1983009808
        %v1406 = vunpack.c.0.s8 %v1405
        %v1407 = vlaneseq
        %v1408 = vshrl.u32 %v1407, 7
        %v1409 = vsub.s32 %v1406, %v1408
        %v1410 = vrot.slane %v1394, %v1409
        %v1411 = vcombine.high %v1403, %v1403
        %1412 = vrot.lane.b32.xlu0 %v1403, 46
        %v1413 = vpop.permute.xlu0 %1412
        %1414 = vrot.lane.b32.xlu0 %v1411, 46
        %v1415 = vpop.permute.xlu0 %1414
        %1416 = vrot.lane.b32.xlu0 %v1410, 46
        %v1417 = vpop.permute.xlu0 %1416
        %vm1418 = vcmask 375808
        %v1419 = vsel %vm1418, %v1413, %v1415
        %v1420 = vsel %vm1418, %v1415, %v1417
        %1424 = vst [vmem:[#allocation2 + $0xa0] sm:$0xc] %v1419
        %1425 = vst [vmem:[#allocation2 + $0xa8] sm:$0xc] %v1420
        %vm1426 = vcmask 371714
        %1427 = vst.msk [vmem:[#allocation2 + $0xb0] sm:$0xc] %vm1426, %v1417
        %v1428 = vld [vmem:[%s230] sm:$0xf]
        %v1430 = vcombine.low %v1428, %v1428
        %v1432 = vunpack.c.l.s4 1983009808
        %v1433 = vunpack.c.0.s8 %v1432
        %v1434 = vlaneseq
        %v1435 = vshrl.u32 %v1434, 7
        %v1436 = vsub.s32 %v1433, %v1435
        %v1437 = vrot.slane %v1430, %v1436
        %v1438 = vcombine.high %v1437, %v1437
        %1439 = vrot.lane.b32.xlu0 %v1437, 46
        %v1440 = vpop.permute.xlu0 %1439
        %1441 = vrot.lane.b32.xlu0 %v1438, 46
        %v1442 = vpop.permute.xlu0 %1441
        %v1443 = vsel %vm1418, %v1440, %v1442
        %vm1446 = vcmask 1043826
        %1447 = vst.msk [vmem:[#allocation2 + $0xb0] sm:$0xc] %vm1446, %v1440
        %1448 = vst [vmem:[#allocation2 + $0xb8] sm:$0xc] %v1443
        %v1449 = vld [vmem:[%s221 + $0x2] sm:$0x3f]
        %v1451 = vcombine.high %v1449, %v1449
        %v1453 = vunpack.c.l.s4 1983009808
        %v1454 = vunpack.c.0.s8 %v1453
        %v1455 = vlaneseq
        %v1456 = vshrl.u32 %v1455, 7
        %v1457 = vsub.s32 %v1454, %v1456
        %v1458 = vrot.slane %v1449, %v1457
        %v1460 = vunpack.c.l.s4 1983009808
        %v1461 = vunpack.c.0.s8 %v1460
        %v1462 = vlaneseq
        %v1463 = vshrl.u32 %v1462, 7
        %v1464 = vsub.s32 %v1461, %v1463
        %v1465 = vrot.slane %v1451, %v1464
        %v1466 = vcombine.low %v1458, %v1458
        %v1467 = vcombine.low %v1465, %v1465
        %1468 = vrot.lane.b32.xlu0 %v1466, 45
        %v1469 = vpop.permute.xlu0 %1468
        %1470 = vrot.lane.b32.xlu0 %v1458, 45
        %v1471 = vpop.permute.xlu0 %1470
        %1472 = vrot.lane.b32.xlu0 %v1467, 45
        %v1473 = vpop.permute.xlu0 %1472
        %vm1474 = vcmask 367616
        %v1475 = vsel %vm1474, %v1469, %v1471
        %v1476 = vsel %vm1474, %v1471, %v1473
        %1480 = vst [vmem:[#allocation2 + $0xa0] sm:$0x30] %v1475
        %1481 = vst [vmem:[#allocation2 + $0xa8] sm:$0x30] %v1476
        %vm1482 = vcmask 365572
        %1483 = vst.msk [vmem:[#allocation2 + $0xb0] sm:$0x30] %vm1482, %v1473
        %v1484 = vld [vmem:[%s230] sm:$0xf]
        %v1487 = vunpack.c.l.s4 1983009808
        %v1488 = vunpack.c.0.s8 %v1487
        %v1489 = vlaneseq
        %v1490 = vshrl.u32 %v1489, 7
        %v1491 = vsub.s32 %v1488, %v1490
        %v1492 = vrot.slane %v1484, %v1491
        %v1493 = vcombine.low %v1492, %v1492
        %1494 = vrot.lane.b32.xlu0 %v1493, 45
        %v1495 = vpop.permute.xlu0 %1494
        %1496 = vrot.lane.b32.xlu0 %v1492, 45
        %v1497 = vpop.permute.xlu0 %1496
        %v1498 = vsel %vm1474, %v1495, %v1497
        %vm1501 = vcmask 1045868
        %1502 = vst.msk [vmem:[#allocation2 + $0xb0] sm:$0x30] %vm1501, %v1495
        %1503 = vst [vmem:[#allocation2 + $0xb8] sm:$0x30] %v1498
        %v1504 = vld [vmem:[%s221 + $0x2] sm:$0x3f]
        %v1506 = vcombine.low %v1504, %v1504
        %v1508 = vunpack.c.l.s4 1983009808
        %v1509 = vunpack.c.0.s8 %v1508
        %v1510 = vlaneseq
        %v1511 = vshrl.u32 %v1510, 7
        %v1512 = vsub.s32 %v1509, %v1511
        %v1513 = vrot.slane %v1506, %v1512
        %v1515 = vunpack.c.l.s4 1983009808
        %v1516 = vunpack.c.0.s8 %v1515
        %v1517 = vlaneseq
        %v1518 = vshrl.u32 %v1517, 7
        %v1519 = vsub.s32 %v1516, %v1518
        %v1520 = vrot.slane %v1504, %v1519
        %v1521 = vcombine.low %v1513, %v1513
        %v1522 = vcombine.low %v1520, %v1520
        %1523 = vrot.lane.b32.xlu0 %v1521, 44
        %v1524 = vpop.permute.xlu0 %1523
        %1525 = vrot.lane.b32.xlu0 %v1513, 44
        %v1526 = vpop.permute.xlu0 %1525
        %1527 = vrot.lane.b32.xlu0 %v1522, 44
        %v1528 = vpop.permute.xlu0 %1527
        %vm1529 = vcmask 359424
        %v1530 = vsel %vm1529, %v1524, %v1526
        %v1531 = vsel %vm1529, %v1526, %v1528
        %1535 = vst [vmem:[#allocation2 + $0xa0] sm:$0xc0] %v1530
        %1536 = vst [vmem:[#allocation2 + $0xa8] sm:$0xc0] %v1531
        %vm1537 = vcmask 359430
        %1538 = vst.msk [vmem:[#allocation2 + $0xb0] sm:$0xc0] %vm1537, %v1528
        %v1539 = vld [vmem:[%s230] sm:$0xf]
        %v1541 = vcombine.low %v1539, %v1539
        %v1543 = vunpack.c.l.s4 1983009808
        %v1544 = vunpack.c.0.s8 %v1543
        %v1545 = vlaneseq
        %v1546 = vshrl.u32 %v1545, 7
        %v1547 = vsub.s32 %v1544, %v1546
        %v1548 = vrot.slane %v1541, %v1547
        %v1549 = vcombine.low %v1548, %v1548
        %1550 = vrot.lane.b32.xlu0 %v1549, 44
        %v1551 = vpop.permute.xlu0 %1550
        %1552 = vrot.lane.b32.xlu0 %v1548, 44
        %v1553 = vpop.permute.xlu0 %1552
        %v1554 = vsel %vm1529, %v1551, %v1553
        %vm1557 = vcmask 1047910
        %1558 = vst.msk [vmem:[#allocation2 + $0xb0] sm:$0xc0] %vm1557, %v1551
        %1559 = vst [vmem:[#allocation2 + $0xb8] sm:$0xc0] %v1554
        %v1560 = vld [vmem:[%s221 + $0x2] sm:$0x3f]
        %v1562 = vcombine.high %v1560, %v1560
        %v1564 = vunpack.c.l.s4 1983009808
        %v1565 = vunpack.c.0.s8 %v1564
        %v1566 = vlaneseq
        %v1567 = vshrl.u32 %v1566, 7
        %v1568 = vsub.s32 %v1565, %v1567
        %v1569 = vrot.slane %v1560, %v1568
        %v1571 = vunpack.c.l.s4 1983009808
        %v1572 = vunpack.c.0.s8 %v1571
        %v1573 = vlaneseq
        %v1574 = vshrl.u32 %v1573, 7
        %v1575 = vsub.s32 %v1572, %v1574
        %v1576 = vrot.slane %v1562, %v1575
        %v1577 = vcombine.high %v1569, %v1569
        %1578 = vrot.lane.b32.xlu0 %v1569, 36
        %v1579 = vpop.permute.xlu0 %1578
        %1580 = vrot.lane.b32.xlu0 %v1577, 36
        %v1581 = vpop.permute.xlu0 %1580
        %1582 = vrot.lane.b32.xlu0 %v1576, 36
        %v1583 = vpop.permute.xlu0 %1582
        %vm1584 = vcmask 293888
        %v1585 = vsel %vm1584, %v1579, %v1581
        %v1586 = vsel %vm1584, %v1581, %v1583
        %1590 = vst [vmem:[#allocation2 + $0xc0] sm:$0x3] %v1585
        %1591 = vst [vmem:[#allocation2 + $0xc8] sm:$0x3] %v1586
        %vm1592 = vcmask 287744
        %1593 = vst.msk [vmem:[#allocation2 + $0xd0] sm:$0x3] %vm1592, %v1583
        %v1594 = vld [vmem:[%s230] sm:$0xf]
        %v1597 = vunpack.c.l.s4 1983009808
        %v1598 = vunpack.c.0.s8 %v1597
        %v1599 = vlaneseq
        %v1600 = vshrl.u32 %v1599, 7
        %v1601 = vsub.s32 %v1598, %v1600
        %v1602 = vrot.slane %v1594, %v1601
        %v1603 = vcombine.high %v1602, %v1602
        %1604 = vrot.lane.b32.xlu0 %v1602, 36
        %v1605 = vpop.permute.xlu0 %1604
        %1606 = vrot.lane.b32.xlu0 %v1603, 36
        %v1607 = vpop.permute.xlu0 %1606
        %v1608 = vsel %vm1584, %v1605, %v1607
        %vm1611 = vcmask 1041696
        %1612 = vst.msk [vmem:[#allocation2 + $0xd0] sm:$0x3] %vm1611, %v1605
        %1613 = vst [vmem:[#allocation2 + $0xd8] sm:$0x3] %v1608
        %v1614 = vld [vmem:[%s221 + $0x2] sm:$0x3f]
        %v1616 = vcombine.low %v1614, %v1614
        %v1618 = vunpack.c.l.s4 1983009808
        %v1619 = vunpack.c.0.s8 %v1618
        %v1620 = vlaneseq
        %v1621 = vshrl.u32 %v1620, 7
        %v1622 = vsub.s32 %v1619, %v1621
        %v1623 = vrot.slane %v1616, %v1622
        %v1625 = vunpack.c.l.s4 1983009808
        %v1626 = vunpack.c.0.s8 %v1625
        %v1627 = vlaneseq
        %v1628 = vshrl.u32 %v1627, 7
        %v1629 = vsub.s32 %v1626, %v1628
        %v1630 = vrot.slane %v1614, %v1629
        %v1631 = vcombine.high %v1623, %v1623
        %1632 = vrot.lane.b32.xlu0 %v1623, 35
        %v1633 = vpop.permute.xlu0 %1632
        %1634 = vrot.lane.b32.xlu0 %v1631, 35
        %v1635 = vpop.permute.xlu0 %1634
        %1636 = vrot.lane.b32.xlu0 %v1630, 35
        %v1637 = vpop.permute.xlu0 %1636
        %vm1638 = vcmask 285696
        %v1639 = vsel %vm1638, %v1633, %v1635
        %v1640 = vsel %vm1638, %v1635, %v1637
        %1644 = vst [vmem:[#allocation2 + $0xc0] sm:$0xc] %v1639
        %1645 = vst [vmem:[#allocation2 + $0xc8] sm:$0xc] %v1640
        %vm1646 = vcmask 281602
        %1647 = vst.msk [vmem:[#allocation2 + $0xd0] sm:$0xc] %vm1646, %v1637
        %v1648 = vld [vmem:[%s230] sm:$0xf]
        %v1650 = vcombine.low %v1648, %v1648
        %v1652 = vunpack.c.l.s4 1983009808
        %v1653 = vunpack.c.0.s8 %v1652
        %v1654 = vlaneseq
        %v1655 = vshrl.u32 %v1654, 7
        %v1656 = vsub.s32 %v1653, %v1655
        %v1657 = vrot.slane %v1650, %v1656
        %v1658 = vcombine.high %v1657, %v1657
        %1659 = vrot.lane.b32.xlu0 %v1657, 35
        %v1660 = vpop.permute.xlu0 %1659
        %1661 = vrot.lane.b32.xlu0 %v1658, 35
        %v1662 = vpop.permute.xlu0 %1661
        %v1663 = vsel %vm1638, %v1660, %v1662
        %vm1666 = vcmask 1043738
        %1667 = vst.msk [vmem:[#allocation2 + $0xd0] sm:$0xc] %vm1666, %v1660
        %1668 = vst [vmem:[#allocation2 + $0xd8] sm:$0xc] %v1663
        %v1669 = vld [vmem:[%s221 + $0x2] sm:$0x3f]
        %v1671 = vcombine.high %v1669, %v1669
        %v1673 = vunpack.c.l.s4 1983009808
        %v1674 = vunpack.c.0.s8 %v1673
        %v1675 = vlaneseq
        %v1676 = vshrl.u32 %v1675, 7
        %v1677 = vsub.s32 %v1674, %v1676
        %v1678 = vrot.slane %v1669, %v1677
        %v1680 = vunpack.c.l.s4 1983009808
        %v1681 = vunpack.c.0.s8 %v1680
        %v1682 = vlaneseq
        %v1683 = vshrl.u32 %v1682, 7
        %v1684 = vsub.s32 %v1681, %v1683
        %v1685 = vrot.slane %v1671, %v1684
        %v1686 = vcombine.low %v1678, %v1678
        %v1687 = vcombine.low %v1685, %v1685
        %1688 = vrot.lane.b32.xlu0 %v1686, 34
        %v1689 = vpop.permute.xlu0 %1688
        %1690 = vrot.lane.b32.xlu0 %v1678, 34
        %v1691 = vpop.permute.xlu0 %1690
        %1692 = vrot.lane.b32.xlu0 %v1687, 34
        %v1693 = vpop.permute.xlu0 %1692
        %vm1694 = vcmask 277504
        %v1695 = vsel %vm1694, %v1689, %v1691
        %v1696 = vsel %vm1694, %v1691, %v1693
        %1700 = vst [vmem:[#allocation2 + $0xc0] sm:$0x30] %v1695
        %1701 = vst [vmem:[#allocation2 + $0xc8] sm:$0x30] %v1696
        %vm1702 = vcmask 275460
        %1703 = vst.msk [vmem:[#allocation2 + $0xd0] sm:$0x30] %vm1702, %v1693
        %v1704 = vld [vmem:[%s230] sm:$0xf]
        %v1707 = vunpack.c.l.s4 1983009808
        %v1708 = vunpack.c.0.s8 %v1707
        %v1709 = vlaneseq
        %v1710 = vshrl.u32 %v1709, 7
        %v1711 = vsub.s32 %v1708, %v1710
        %v1712 = vrot.slane %v1704, %v1711
        %v1713 = vcombine.low %v1712, %v1712
        %1714 = vrot.lane.b32.xlu0 %v1713, 34
        %v1715 = vpop.permute.xlu0 %1714
        %1716 = vrot.lane.b32.xlu0 %v1712, 34
        %v1717 = vpop.permute.xlu0 %1716
        %v1718 = vsel %vm1694, %v1715, %v1717
        %vm1721 = vcmask 1045780
        %1722 = vst.msk [vmem:[#allocation2 + $0xd0] sm:$0x30] %vm1721, %v1715
        %1723 = vst [vmem:[#allocation2 + $0xd8] sm:$0x30] %v1718
        %1724 = vst [vmem:[#allocation2 + $0xc0] sm:$0xc0] 0
        %1725 = vst [vmem:[#allocation2 + $0xc8] sm:$0xc0] 0
        %1726 = vst [vmem:[#allocation2 + $0xd0] sm:$0xc0] 0
        %1727 = vst [vmem:[#allocation2 + $0xd8] sm:$0xc0] 0
        %1728 = vst [vmem:[#allocation2 + $0xe0] sm:$0xff] 0
        %1729 = vst [vmem:[#allocation2 + $0xe8] sm:$0xff] 0
        %1730 = vst [vmem:[#allocation2 + $0xf0] sm:$0xff] 0
        %1731 = vst [vmem:[#allocation2 + $0xf8] sm:$0xff] 0
        %v1732 = vld [vmem:[#allocation8] sm:$0xf]
        %v1733 = vld [vmem:[#allocation2] sm:$0xff]
        %v1734 = vld [vmem:[#allocation2 + $0x8] sm:$0xff]
        %v1735 = vld [vmem:[#allocation2 + $0x10] sm:$0xff]
        %v1736 = vld [vmem:[#allocation2 + $0x18] sm:$0xff]
        %v1737 = vld [vmem:[#allocation2 + $0x20] sm:$0xff]
        %v1738 = vld [vmem:[#allocation2 + $0x28] sm:$0xff]
        %v1739 = vld [vmem:[#allocation2 + $0x30] sm:$0xff]
        %v1740 = vld [vmem:[#allocation2 + $0x38] sm:$0xff]
        %v1741 = vld [vmem:[#allocation2 + $0x40] sm:$0xff]
        %v1742 = vld [vmem:[#allocation2 + $0x48] sm:$0xff]
        %v1743 = vld [vmem:[#allocation2 + $0x50] sm:$0xff]
        %v1744 = vld [vmem:[#allocation2 + $0x58] sm:$0xff]
        %v1745 = vld [vmem:[#allocation2 + $0x60] sm:$0xff]
        %v1746 = vld [vmem:[#allocation2 + $0x68] sm:$0xff]
        %v1747 = vld [vmem:[#allocation2 + $0x70] sm:$0xff]
        %v1748 = vld [vmem:[#allocation2 + $0x78] sm:$0xff]
        %v1749 = vld [vmem:[#allocation2 + $0x80] sm:$0xff]
        %v1750 = vld [vmem:[#allocation2 + $0x88] sm:$0xff]
        %v1751 = vld [vmem:[#allocation2 + $0x90] sm:$0xff]
        %v1752 = vld [vmem:[#allocation2 + $0x98] sm:$0xff]
        %v1753 = vld [vmem:[#allocation2 + $0xa0] sm:$0xff]
        %v1754 = vld [vmem:[#allocation2 + $0xa8] sm:$0xff]
        %v1755 = vld [vmem:[#allocation2 + $0xb0] sm:$0xff]
        %v1756 = vld [vmem:[#allocation2 + $0xb8] sm:$0xff]
        %v1757 = vld [vmem:[#allocation2 + $0xc0] sm:$0xff]
        %v1758 = vld [vmem:[#allocation2 + $0xc8] sm:$0xff]
        %v1759 = vld [vmem:[#allocation2 + $0xd0] sm:$0xff]
        %v1760 = vld [vmem:[#allocation2 + $0xd8] sm:$0xff]
        %v1761 = vld [vmem:[#allocation2 + $0xe0] sm:$0xff]
        %v1762 = vld [vmem:[#allocation2 + $0xe8] sm:$0xff]
        %v1763 = vld [vmem:[#allocation2 + $0xf0] sm:$0xff]
        %v1764 = vld [vmem:[#allocation2 + $0xf8] sm:$0xff]
        %1765 = vmatprep.subr.bf16.mxu0 %v1734
        %1766 = vmatpush1.bf16.msra.mxu0 %v1733
        %1767 = vmatprep.subr.bf16.mxu0 %v1738
        %1768 = vmatpush1.bf16.msra.mxu0 %v1737
        %1769 = vmatprep.subr.bf16.mxu0 %v1742
        %1770 = vmatpush1.bf16.msra.mxu0 %v1741
        %1771 = vmatprep.subr.bf16.mxu0 %v1746
        %1772 = vmatpush1.bf16.msra.mxu0 %v1745
        %1773 = vmatprep.subr.bf16.mxu0 %v1750
        %1774 = vmatpush1.bf16.msra.mxu0 %v1749
        %1775 = vmatprep.subr.bf16.mxu0 %v1754
        %1776 = vmatpush1.bf16.msra.mxu0 %v1753
        %1777 = vmatprep.subr.bf16.mxu0 %v1758
        %1778 = vmatpush1.bf16.msra.mxu0 %v1757
        %1779 = vmatprep.subr.bf16.mxu0 %v1762
        %1780 = vmatpush1.bf16.msra.mxu0 %v1761
        %1781 = vmatprep.subr.bf16.mxu0 0
        %1782 = vmatpush1.bf16.msra.mxu0 0
        %1783 = vmatprep.subr.bf16.mxu0 0
        %1784 = vmatpush1.bf16.msra.mxu0 0
        %1785 = vmatprep.subr.bf16.mxu0 0
        %1786 = vmatpush1.bf16.msra.mxu0 0
        %1787 = vmatprep.subr.bf16.mxu0 0
        %1788 = vmatpush1.bf16.msra.mxu0 0
        %1789 = vmatprep.subr.bf16.mxu0 0
        %1790 = vmatpush1.bf16.msra.mxu0 0
        %1791 = vmatprep.subr.bf16.mxu0 0
        %1792 = vmatpush1.bf16.msra.mxu0 0
        %1793 = vmatprep.subr.bf16.mxu0 0
        %1794 = vmatpush1.bf16.msra.mxu0 0
        %1795 = vmatprep.subr.bf16.mxu0 0
        %1796 = vmatpush1.bf16.msra.mxu0 0
        %1797 = vmatprep.mubr.bf16.mxu0 0
        %1798 = vmatmul.mubr.bf16.gmra.mrb[0].mxu0 %v1732
        %v1799 = vpop.f32.mrb[0].mxu0
        %v1800 = vadd.f32 0.0, %v1799
        %v1801 = vpop.f32.mrb[0].mxu0
        %v1802 = vadd.f32 0.0, %v1801
        %v1803 = vpop.f32.mrb[0].mxu0
        %v1804 = vpop.f32.mrb[0].mxu0
        %1805 = vdwg.mxu0
        %1806 = vmatprep.subr.bf16.mxu0 %v1736
        %1807 = vmatpush1.bf16.msra.mxu0 %v1735
        %1808 = vmatprep.subr.bf16.mxu0 %v1740
        %1809 = vmatpush1.bf16.msra.mxu0 %v1739
        %1810 = vmatprep.subr.bf16.mxu0 %v1744
        %1811 = vmatpush1.bf16.msra.mxu0 %v1743
        %1812 = vmatprep.subr.bf16.mxu0 %v1748
        %1813 = vmatpush1.bf16.msra.mxu0 %v1747
        %1814 = vmatprep.subr.bf16.mxu0 %v1752
        %1815 = vmatpush1.bf16.msra.mxu0 %v1751
        %1816 = vmatprep.subr.bf16.mxu0 %v1756
        %1817 = vmatpush1.bf16.msra.mxu0 %v1755
        %1818 = vmatprep.subr.bf16.mxu0 %v1760
        %1819 = vmatpush1.bf16.msra.mxu0 %v1759
        %1820 = vmatprep.subr.bf16.mxu0 %v1764
        %1821 = vmatpush1.bf16.msra.mxu0 %v1763
        %1822 = vmatprep.subr.bf16.mxu0 0
        %1823 = vmatpush1.bf16.msra.mxu0 0
        %1824 = vmatprep.subr.bf16.mxu0 0
        %1825 = vmatpush1.bf16.msra.mxu0 0
        %1826 = vmatprep.subr.bf16.mxu0 0
        %1827 = vmatpush1.bf16.msra.mxu0 0
        %1828 = vmatprep.subr.bf16.mxu0 0
        %1829 = vmatpush1.bf16.msra.mxu0 0
        %1830 = vmatprep.subr.bf16.mxu0 0
        %1831 = vmatpush1.bf16.msra.mxu0 0
        %1832 = vmatprep.subr.bf16.mxu0 0
        %1833 = vmatpush1.bf16.msra.mxu0 0
        %1834 = vmatprep.subr.bf16.mxu0 0
        %1835 = vmatpush1.bf16.msra.mxu0 0
        %1836 = vmatprep.subr.bf16.mxu0 0
        %1837 = vmatpush1.bf16.msra.mxu0 0
        %1838 = vmatprep.mubr.bf16.mxu0 0
        %1839 = vmatmul.mubr.bf16.gmra.mrb[0].mxu0 %v1732
        %v1840 = vpop.f32.mrb[0].mxu0
        %v1841 = vadd.f32 0.0, %v1840
        %v1842 = vpop.f32.mrb[0].mxu0
        %v1843 = vadd.f32 0.0, %v1842
        %v1844 = vpop.f32.mrb[0].mxu0
        %v1845 = vpop.f32.mrb[0].mxu0
        %1846 = vdwg.mxu0
        %1847 = vst [vmem:[%s261] sm:$0xff] %v1800
        %1848 = vst [vmem:[%s261 + $0x8] sm:$0xff] %v1802
        %1849 = vst [vmem:[%s261 + $0x10] sm:$0xff] %v1841
        %1850 = vst [vmem:[%s261 + $0x18] sm:$0xff] %v1843
        %s1851 = sand.u32 %s124, 1
        %s1852 = scalar_lea.sflag [#allocation5], %s1851
        %s1853 = sand.u32 %s124, 1
        %s1854 = smul.addr %s1853, 32
        %s1855 = scalar_lea.vmem [#allocation9], %s1854
        // Predicated region
        $region45: #{_conv3d_flat.1} parent=31 // pred_check
          %p1856 = pneg %p134
        $region46: #{_conv3d_flat.1} parent=31 // pred_check_branch
          %1858 = sbr.rel (%p1856) target = $region48
        $region47: #{_conv3d_flat.1} parent=31 // pred_region
          %s1859 = smul.u32 4, %s28
          %s1861 = ssub.s32 512, 512
          %1862 = vsyncadd %s1852, %s1861
          %s1863 = smul.addr %s27, 8
          %s1864 = sadd.s32 %s1859, %s1863
          %s1865 = smul.addr %s1864, 128
          %s1866 = scalar_lea.hbm %s3, %s1865
          %s1868 = sshll.u32 %s1855, 4
          %s1869 = int_to_ptr.vmem [resolvable:$true] %s1868
          %1871 = dma.vmem_to_hbm [thread:$0]  %s1869, 512, %s1866, %s1852
        $region48: #{_conv3d_flat.1} parent=31 // pred_fallthru
          _
      $region32: #{_conv3d_flat.1} parent=5 // pred_fallthru
        _
      %p1872 = scmp.le.s32.totalorder 2, %s18
      // Predicated region
      $region49: #{_conv3d_flat.1} parent=5 // pred_check
        %p1873 = pneg %p1872
      $region50: #{_conv3d_flat.1} parent=5 // pred_check_branch
        %1875 = sbr.rel (%p1873) target = $region52
      $region51: #{_conv3d_flat.1} parent=5 // pred_region
        %s1876 = ssub.s32 %s18, 2
        // Predicated region
        $region53: #{_conv3d_flat.1} parent=51 // pred_check
          %p1877 = pneg %p140
        $region54: #{_conv3d_flat.1} parent=51 // pred_check_branch
          %1879 = sbr.rel (%p1877) target = $region56
        $region55: #{_conv3d_flat.1} parent=51 // pred_region
          %s1880 = sand.u32 %s125, 1
          %s1881 = scalar_lea.sflag [#allocation5], %s1880
          %s1882 = sand.u32 %s125, 1
          %s1883 = smul.addr %s1882, 32
          %s1884 = scalar_lea.vmem [#allocation9], %s1883
          %1885 = dma.done %s1881, 512
        $region56: #{_conv3d_flat.1} parent=51 // pred_fallthru
          _
      $region52: #{_conv3d_flat.1} parent=5 // pred_fallthru
        _
    $region6: #{_conv3d_flat.1} parent=1 // loop_footer
      %s22 = sadd.s32 1, %s18
    $region7: #{_conv3d_flat.1} parent=1 // loop_footer_branch
      %17 = sbr.rel target = $region3
    $region8: #{_conv3d_flat.1} parent=1 // loop_exit
      _
    %1886 = vsyncpa [#allocation4], 1
    %s1887 = scalar_lea.sflag [#allocation4], 1
    %1888 = vsyncpa %s1887, 1
    %1889 = vsyncpa [#allocation7], 1
    %s1890 = scalar_lea.sflag [#allocation7], 1
    %1891 = vsyncpa %s1890, 1
    %1892 = vsyncpa [#allocation5], 1
    %s1893 = scalar_lea.sflag [#allocation5], 1
    %1894 = vsyncpa %s1893, 1

</llo_original>
